<compile_context>
chip_gen: v7x
topology: tpu7x:2x2x1
jax: 0.10.0
libtpu: 0.0.40
codegen_flags: <defaults>
</compile_context>

<pallas_src>
import jax
import jax.numpy as jnp
from jax.experimental import pallas as pl
from jax.experimental.pallas import tpu as pltpu


def _round_up(x, m):
    return (x + m - 1) // m * m


def _pad_gate_cols(w, h, h_pad):
    """Pad a (rows, 4*h) PyTorch-gate-layout matrix to (rows, 4*h_pad), per gate."""
    if h_pad == h:
        return w
    rows = w.shape[0]
    w4 = w.reshape(rows, 4, h)
    w4 = jnp.pad(w4, ((0, 0), (0, 0), (0, h_pad - h)))
    return w4.reshape(rows, 4 * h_pad)


def _make_lstm_kernel(b_blk, h_pad, tc, t_total, unroll):
    def kernel(x_ref, w_ref, b_ref, out_ref, h_scr, c_scr):
        chunk = pl.program_id(1)

        @pl.when(chunk == 0)
        def _():
            h_scr[...] = jnp.zeros_like(h_scr)
            c_scr[...] = jnp.zeros_like(c_scr)

        # Hoist loop-invariant work out of the per-timestep loop.
        w = w_ref[...]                                              # (E+H, 4H) bf16
        bias = jnp.broadcast_to(b_ref[...], (b_blk, 4 * h_pad))     # (B, 4H) f32

        base_t = chunk * tc

        def step(s, carry):
            h, c = carry
            x_t = x_ref[s]                                          # (B, E) bf16
            # Fused gate matmul: one (B, E+H) x (E+H, 4H) MXU push per step.
            xh = jnp.concatenate([x_t, h.astype(jnp.bfloat16)], axis=-1)
            gates = jnp.dot(xh, w, preferred_element_type=jnp.float32) + bias
            # PyTorch gate layout [i, f, g, o]; H_pad-aligned lane slices.
            i_g = jax.nn.sigmoid(gates[:, 0 * h_pad:1 * h_pad])
            f_g = jax.nn.sigmoid(gates[:, 1 * h_pad:2 * h_pad])
            g_g = jnp.tanh(gates[:, 2 * h_pad:3 * h_pad])
            o_g = jax.nn.sigmoid(gates[:, 3 * h_pad:4 * h_pad])
            c_new = f_g * c + i_g * g_g
            h_new = o_g * jnp.tanh(c_new)
            # Mask time-padding steps (beyond the real sequence length).
            valid = (base_t + s) < t_total
            h = jnp.where(valid, h_new, h)
            c = jnp.where(valid, c_new, c)
            return h, c

        h, c = jax.lax.fori_loop(0, tc, step, (h_scr[...], c_scr[...]),
                                 unroll=unroll)
        h_scr[...] = h
        c_scr[...] = c

        @pl.when(chunk == pl.num_programs(1) - 1)
        def _():
            out_ref[...] = h          # lane-dense (B_blk, H_pad) final hidden state

    return kernel


def sentiment_rnn_forward(x_tokens, params, *, time_chunk=64, batch_block=128):
    """x_tokens: (B, T) int32 token ids. Returns (B, 1) float32 logits."""
    emb_table = params["embedding"]            # (V, E), row 0 zeros (padding_idx=0)
    w_ih = params["w_ih"]                      # (E, 4H)  (= weight_ih_l0.T)
    w_hh = params["w_hh"]                      # (H, 4H)  (= weight_hh_l0.T)
    bias = params["bias"]                      # (1, 4H)  (= b_ih + b_hh)
    fc_w = params["fc_w"]                      # (H, 1)   (= fc.weight.T)
    fc_b = params["fc_b"]                      # (1, 1)

    B, T = x_tokens.shape
    E = emb_table.shape[1]
    H = w_hh.shape[0]

    # Lane / sublane aligned padded sizes.
    E_pad = _round_up(E, 128)
    H_pad = _round_up(H, 128)
    B_blk = min(_round_up(B, 8), _round_up(batch_block, 8))
    B_pad = _round_up(B, B_blk)
    n_b = B_pad // B_blk

    Tc = min(time_chunk, T)
    n_chunks = (T + Tc - 1) // Tc
    T_pad = n_chunks * Tc
    unroll = Tc <= 16

    # Embedding gather (glue); pad B/T/E, go time-major, cast activations to bf16.
    embedded = jnp.take(emb_table, x_tokens, axis=0)             # (B, T, E) f32
    embedded = jnp.pad(embedded,
                       ((0, B_pad - B), (0, T_pad - T), (0, E_pad - E)))
    embedded_tm = jnp.transpose(embedded, (1, 0, 2)).astype(jnp.bfloat16)

    # Fused, gate-padded weight [w_ih; w_hh] -> (E_pad + H_pad, 4*H_pad) bf16.
    w_ih_p = jnp.pad(_pad_gate_cols(w_ih, H, H_pad), ((0, E_pad - E), (0, 0)))
    w_hh_p = jnp.pad(_pad_gate_cols(w_hh, H, H_pad), ((0, H_pad - H), (0, 0)))
    w_fused = jnp.concatenate([w_ih_p, w_hh_p], axis=0).astype(jnp.bfloat16)
    bias_p = _pad_gate_cols(bias, H, H_pad)                      # (1, 4*H_pad) f32

    kernel = _make_lstm_kernel(B_blk, H_pad, Tc, T, unroll)

    h_last = pl.pallas_call(
        kernel,
        out_shape=jax.ShapeDtypeStruct((B_pad, H_pad), jnp.float32),
        grid_spec=pltpu.PrefetchScalarGridSpec(
            num_scalar_prefetch=0,
            grid=(n_b, n_chunks),                                # (batch, time)
            in_specs=[
                pl.BlockSpec((Tc, B_blk, E_pad), lambda b, t: (t, b, 0)),   # x chunk
                pl.BlockSpec((E_pad + H_pad, 4 * H_pad), lambda b, t: (0, 0)),
                pl.BlockSpec((1, 4 * H_pad), lambda b, t: (0, 0)),
            ],
            out_specs=pl.BlockSpec((B_blk, H_pad), lambda b, t: (b, 0)),
            scratch_shapes=[
                pltpu.VMEM((B_blk, H_pad), jnp.float32),   # h carry
                pltpu.VMEM((B_blk, H_pad), jnp.float32),   # c carry
            ],
        ),
        compiler_params=pltpu.CompilerParams(
            # batch blocks independent (v7x megacore); time is a sequential recurrence
            dimension_semantics=("parallel", "arbitrary"),
        ),
    )(embedded_tm, w_fused, bias_p)

    # Final Linear fc(hidden) as JAX glue on the real rows/lanes (lane-dense kernel
    # output avoids a masked (B,1) store inside the kernel).
    h_real = h_last[:B, :H]
    return h_real @ fc_w + fc_b


def init_params(key, vocab_size, embedding_dim, hidden_dim):
    k1, k2, k3, k4, k5, k6, k7 = jax.random.split(key, 7)
    scale = 0.1
    emb = scale * jax.random.normal(k1, (vocab_size, embedding_dim), jnp.float32)
    emb = emb.at[0].set(0.0)   # padding_idx=0
    w_ih = scale * jax.random.normal(k2, (embedding_dim, 4 * hidden_dim), jnp.float32)
    w_hh = scale * jax.random.normal(k3, (hidden_dim, 4 * hidden_dim), jnp.float32)
    b_ih = scale * jax.random.normal(k4, (4 * hidden_dim,), jnp.float32)
    b_hh = scale * jax.random.normal(k5, (4 * hidden_dim,), jnp.float32)
    fc_w = scale * jax.random.normal(k6, (hidden_dim, 1), jnp.float32)
    fc_b = scale * jax.random.normal(k7, (1,), jnp.float32)
    return {
        "embedding": emb,
        "w_ih": w_ih,
        "w_hh": w_hh,
        "bias": (b_ih + b_hh).reshape(1, 4 * hidden_dim),
        "fc_w": fc_w,
        "fc_b": fc_b.reshape(1, 1),
    }


def reference_forward(x_tokens, params):
    """Pure-JAX f32 reference of the PyTorch forward (for sanity check)."""
    emb = jnp.take(params["embedding"], x_tokens, axis=0)    # (B, T, E)
    B, T, E = emb.shape
    H = params["w_hh"].shape[0]

    def step(carry, x_t):
        h, c = carry
        gates = x_t @ params["w_ih"] + h @ params["w_hh"] + params["bias"]
        i = jax.nn.sigmoid(gates[:, 0 * H:1 * H])
        f = jax.nn.sigmoid(gates[:, 1 * H:2 * H])
        g = jnp.tanh(gates[:, 2 * H:3 * H])
        o = jax.nn.sigmoid(gates[:, 3 * H:4 * H])
        c = f * c + i * g
        h = o * jnp.tanh(c)
        return (h, c), None

    h0 = jnp.zeros((B, H), jnp.float32)
    c0 = jnp.zeros((B, H), jnp.float32)
    (h, _), _ = jax.lax.scan(step, (h0, c0), jnp.transpose(emb, (1, 0, 2)))
    return h @ params["fc_w"] + params["fc_b"]


if __name__ == "__main__":
    VOCAB, EMB, HID = 50, 32, 32
    B, T = 2, 8

    key = jax.random.PRNGKey(0)
    pkey, xkey = jax.random.split(key)
    params = init_params(pkey, VOCAB, EMB, HID)
    x = jax.random.randint(xkey, (B, T), 0, VOCAB, dtype=jnp.int32)

    out = jax.block_until_ready(sentiment_rnn_forward(x, params))
    ref = jax.block_until_ready(reference_forward(x, params))

    assert out.shape == (B, 1)
    # bf16 matmul inputs (f32 accumulate / f32 gates) vs pure-f32 reference.
    assert jnp.allclose(out, ref, atol=1e-2, rtol=1e-2), (out, ref)
    print("KERNEL_OK")
</pallas_src>

<mosaic_0001>
module attributes {stable_mosaic.version = 11 : i64} {
  func.func @kernel(%arg0: i32, %arg1: i32, %arg2: memref<8x8x128xbf16, #tpu.memory_space<vmem>>, %arg3: memref<256x512xbf16, #tpu.memory_space<vmem>>, %arg4: memref<1x512xf32, #tpu.memory_space<vmem>>, %arg5: memref<8x128xf32, #tpu.memory_space<vmem>>, %arg6: memref<8x128xf32, #tpu.memory_space<vmem>>, %arg7: memref<8x128xf32, #tpu.memory_space<vmem>>) attributes {dimension_semantics = [#tpu.dimension_semantics<parallel>, #tpu.dimension_semantics<arbitrary>], iteration_bounds = array<i64: 1, 1>, scalar_prefetch = 0 : i64, scratch_operands = 2 : i64, tpu.core_type = #tpu.core_type<tc>, window_params = [{transform_indices = @transform_0, window_bounds = array<i64: 8, 8, 128>}, {pipeline_mode = #tpu.pipeline_mode<synchronous>, transform_indices = @transform_1, window_bounds = array<i64: 256, 512>}, {pipeline_mode = #tpu.pipeline_mode<synchronous>, transform_indices = @transform_2, window_bounds = array<i64: 1, 512>}, {transform_indices = @transform_3, window_bounds = array<i64: 8, 128>}]} {
    %c0_i32 = arith.constant 0 : i32
    %0 = arith.cmpi eq, %arg1, %c0_i32 : i32
    %1 = arith.extui %0 : i1 to i32
    %c0_i32_0 = arith.constant 0 : i32
    %2 = arith.cmpi ne, %1, %c0_i32_0 : i32
    scf.if %2 {
      %cst_71 = arith.constant 0.000000e+00 : f32
      %303 = vector.broadcast %cst_71 : f32 to vector<8x128xf32>
      %c0_72 = arith.constant 0 : index
      %c0_73 = arith.constant 0 : index
      %304 = vector.load %arg6[%c0_72, %c0_73] : memref<8x128xf32, #tpu.memory_space<vmem>>, vector<8x128xf32>
      tpu.vector_store %arg6[%c0_72, %c0_73], %303 {strides = array<i32>} : memref<8x128xf32, #tpu.memory_space<vmem>>, vector<8x128xf32>,
      %cst_74 = arith.constant 0.000000e+00 : f32
      %305 = vector.broadcast %cst_74 : f32 to vector<8x128xf32>
      %c0_75 = arith.constant 0 : index
      %c0_76 = arith.constant 0 : index
      %306 = vector.load %arg7[%c0_75, %c0_76] : memref<8x128xf32, #tpu.memory_space<vmem>>, vector<8x128xf32>
      tpu.vector_store %arg7[%c0_75, %c0_76], %305 {strides = array<i32>} : memref<8x128xf32, #tpu.memory_space<vmem>>, vector<8x128xf32>,
    } else {
    }
    %c0 = arith.constant 0 : index
    %c0_1 = arith.constant 0 : index
    %3 = vector.load %arg3[%c0, %c0_1] : memref<256x512xbf16, #tpu.memory_space<vmem>>, vector<256x512xbf16>
    %c0_2 = arith.constant 0 : index
    %c0_3 = arith.constant 0 : index
    %4 = vector.load %arg4[%c0_2, %c0_3] : memref<1x512xf32, #tpu.memory_space<vmem>>, vector<1x512xf32>
    %5 = vector.shape_cast %4 : vector<1x512xf32> to vector<1x512xf32>
    %6 = vector.broadcast %5 : vector<1x512xf32> to vector<8x512xf32>
    %c8_i32 = arith.constant 8 : i32
    %7 = arith.muli %arg1, %c8_i32 : i32
    %c0_4 = arith.constant 0 : index
    %c0_5 = arith.constant 0 : index
    %8 = vector.load %arg6[%c0_4, %c0_5] : memref<8x128xf32, #tpu.memory_space<vmem>>, vector<8x128xf32>
    %c0_6 = arith.constant 0 : index
    %c0_7 = arith.constant 0 : index
    %9 = vector.load %arg7[%c0_6, %c0_7] : memref<8x128xf32, #tpu.memory_space<vmem>>, vector<8x128xf32>
    %c0_i32_8 = arith.constant 0 : i32
    %10 = arith.index_cast %c0_i32_8 : i32 to index
    %c0_9 = arith.constant 0 : index
    %c0_10 = arith.constant 0 : index
    %11 = vector.load %arg2[%10, %c0_9, %c0_10] : memref<8x8x128xbf16, #tpu.memory_space<vmem>>, vector<1x8x128xbf16>
    %12 = vector.shape_cast %11 : vector<1x8x128xbf16> to vector<8x128xbf16>
    %13 = arith.truncf %8 : vector<8x128xf32> to vector<8x128xbf16>
    %14 = tpu.concatenate %12, %13 in 1 : vector<8x128xbf16>, vector<8x128xbf16> -> vector<8x256xbf16>
    %cst = arith.constant dense<0.000000e+00> : vector<8x512xf32>
    %15 = tpu.matmul %14, %3, %cst {dimension_numbers = #tpu.dot_dimension_numbers<[1], [0], [0], [1], [0, 0, 1, 1], [], []>} : vector<8x256xbf16>, vector<256x512xbf16>, vector<8x512xf32> -> vector<8x512xf32>
    %16 = arith.addf %15, %6 : vector<8x512xf32>
    %17 = vector.extract_strided_slice %16 {offsets = [0, 0], sizes = [8, 128], strides = [1, 1]} : vector<8x512xf32> to vector<8x128xf32>
    %18 = arith.negf %17 : vector<8x128xf32>
    %19 = math.exp %18 : vector<8x128xf32>
    %cst_11 = arith.constant 1.000000e+00 : f32
    %20 = vector.broadcast %cst_11 : f32 to vector<8x128xf32>
    %21 = arith.addf %20, %19 : vector<8x128xf32>
    %22 = arith.divf %20, %21 : vector<8x128xf32>
    %23 = vector.extract_strided_slice %16 {offsets = [0, 128], sizes = [8, 128], strides = [1, 1]} : vector<8x512xf32> to vector<8x128xf32>
    %24 = arith.negf %23 : vector<8x128xf32>
    %25 = math.exp %24 : vector<8x128xf32>
    %cst_12 = arith.constant 1.000000e+00 : f32
    %26 = vector.broadcast %cst_12 : f32 to vector<8x128xf32>
    %27 = arith.addf %26, %25 : vector<8x128xf32>
    %28 = arith.divf %26, %27 : vector<8x128xf32>
    %29 = vector.extract_strided_slice %16 {offsets = [0, 256], sizes = [8, 128], strides = [1, 1]} : vector<8x512xf32> to vector<8x128xf32>
    %30 = math.tanh %29 : vector<8x128xf32>
    %31 = vector.extract_strided_slice %16 {offsets = [0, 384], sizes = [8, 128], strides = [1, 1]} : vector<8x512xf32> to vector<8x128xf32>
    %32 = arith.negf %31 : vector<8x128xf32>
    %33 = math.exp %32 : vector<8x128xf32>
    %cst_13 = arith.constant 1.000000e+00 : f32
    %34 = vector.broadcast %cst_13 : f32 to vector<8x128xf32>
    %35 = arith.addf %34, %33 : vector<8x128xf32>
    %36 = arith.divf %34, %35 : vector<8x128xf32>
    %37 = arith.mulf %28, %9 : vector<8x128xf32>
    %38 = arith.mulf %22, %30 : vector<8x128xf32>
    %39 = arith.addf %37, %38 : vector<8x128xf32>
    %40 = math.tanh %39 : vector<8x128xf32>
    %41 = arith.mulf %36, %40 : vector<8x128xf32>
    %42 = arith.addi %7, %c0_i32_8 : i32
    %c8_i32_14 = arith.constant 8 : i32
    %43 = arith.cmpi slt, %42, %c8_i32_14 : i32
    %44 = arith.select %43, %41, %8 : vector<8x128xf32>
    %45 = arith.select %43, %39, %9 : vector<8x128xf32>
    %c1_i32 = arith.constant 1 : i32
    %46 = arith.index_cast %c1_i32 : i32 to index
    %c0_15 = arith.constant 0 : index
    %c0_16 = arith.constant 0 : index
    %47 = vector.load %arg2[%46, %c0_15, %c0_16] : memref<8x8x128xbf16, #tpu.memory_space<vmem>>, vector<1x8x128xbf16>
    %48 = vector.shape_cast %47 : vector<1x8x128xbf16> to vector<8x128xbf16>
    %49 = arith.truncf %44 : vector<8x128xf32> to vector<8x128xbf16>
    %50 = tpu.concatenate %48, %49 in 1 : vector<8x128xbf16>, vector<8x128xbf16> -> vector<8x256xbf16>
    %cst_17 = arith.constant dense<0.000000e+00> : vector<8x512xf32>
    %51 = tpu.matmul %50, %3, %cst_17 {dimension_numbers = #tpu.dot_dimension_numbers<[1], [0], [0], [1], [0, 0, 1, 1], [], []>} : vector<8x256xbf16>, vector<256x512xbf16>, vector<8x512xf32> -> vector<8x512xf32>
    %52 = arith.addf %51, %6 : vector<8x512xf32>
    %53 = vector.extract_strided_slice %52 {offsets = [0, 0], sizes = [8, 128], strides = [1, 1]} : vector<8x512xf32> to vector<8x128xf32>
    %54 = arith.negf %53 : vector<8x128xf32>
    %55 = math.exp %54 : vector<8x128xf32>
    %cst_18 = arith.constant 1.000000e+00 : f32
    %56 = vector.broadcast %cst_18 : f32 to vector<8x128xf32>
    %57 = arith.addf %56, %55 : vector<8x128xf32>
    %58 = arith.divf %56, %57 : vector<8x128xf32>
    %59 = vector.extract_strided_slice %52 {offsets = [0, 128], sizes = [8, 128], strides = [1, 1]} : vector<8x512xf32> to vector<8x128xf32>
    %60 = arith.negf %59 : vector<8x128xf32>
    %61 = math.exp %60 : vector<8x128xf32>
    %cst_19 = arith.constant 1.000000e+00 : f32
    %62 = vector.broadcast %cst_19 : f32 to vector<8x128xf32>
    %63 = arith.addf %62, %61 : vector<8x128xf32>
    %64 = arith.divf %62, %63 : vector<8x128xf32>
    %65 = vector.extract_strided_slice %52 {offsets = [0, 256], sizes = [8, 128], strides = [1, 1]} : vector<8x512xf32> to vector<8x128xf32>
    %66 = math.tanh %65 : vector<8x128xf32>
    %67 = vector.extract_strided_slice %52 {offsets = [0, 384], sizes = [8, 128], strides = [1, 1]} : vector<8x512xf32> to vector<8x128xf32>
    %68 = arith.negf %67 : vector<8x128xf32>
    %69 = math.exp %68 : vector<8x128xf32>
    %cst_20 = arith.constant 1.000000e+00 : f32
    %70 = vector.broadcast %cst_20 : f32 to vector<8x128xf32>
    %71 = arith.addf %70, %69 : vector<8x128xf32>
    %72 = arith.divf %70, %71 : vector<8x128xf32>
    %73 = arith.mulf %64, %45 : vector<8x128xf32>
    %74 = arith.mulf %58, %66 : vector<8x128xf32>
    %75 = arith.addf %73, %74 : vector<8x128xf32>
    %76 = math.tanh %75 : vector<8x128xf32>
    %77 = arith.mulf %72, %76 : vector<8x128xf32>
    %78 = arith.addi %7, %c1_i32 : i32
    %c8_i32_21 = arith.constant 8 : i32
    %79 = arith.cmpi slt, %78, %c8_i32_21 : i32
    %80 = arith.select %79, %77, %44 : vector<8x128xf32>
    %81 = arith.select %79, %75, %45 : vector<8x128xf32>
    %c2_i32 = arith.constant 2 : i32
    %82 = arith.index_cast %c2_i32 : i32 to index
    %c0_22 = arith.constant 0 : index
    %c0_23 = arith.constant 0 : index
    %83 = vector.load %arg2[%82, %c0_22, %c0_23] : memref<8x8x128xbf16, #tpu.memory_space<vmem>>, vector<1x8x128xbf16>
    %84 = vector.shape_cast %83 : vector<1x8x128xbf16> to vector<8x128xbf16>
    %85 = arith.truncf %80 : vector<8x128xf32> to vector<8x128xbf16>
    %86 = tpu.concatenate %84, %85 in 1 : vector<8x128xbf16>, vector<8x128xbf16> -> vector<8x256xbf16>
    %cst_24 = arith.constant dense<0.000000e+00> : vector<8x512xf32>
    %87 = tpu.matmul %86, %3, %cst_24 {dimension_numbers = #tpu.dot_dimension_numbers<[1], [0], [0], [1], [0, 0, 1, 1], [], []>} : vector<8x256xbf16>, vector<256x512xbf16>, vector<8x512xf32> -> vector<8x512xf32>
    %88 = arith.addf %87, %6 : vector<8x512xf32>
    %89 = vector.extract_strided_slice %88 {offsets = [0, 0], sizes = [8, 128], strides = [1, 1]} : vector<8x512xf32> to vector<8x128xf32>
    %90 = arith.negf %89 : vector<8x128xf32>
    %91 = math.exp %90 : vector<8x128xf32>
    %cst_25 = arith.constant 1.000000e+00 : f32
    %92 = vector.broadcast %cst_25 : f32 to vector<8x128xf32>
    %93 = arith.addf %92, %91 : vector<8x128xf32>
    %94 = arith.divf %92, %93 : vector<8x128xf32>
    %95 = vector.extract_strided_slice %88 {offsets = [0, 128], sizes = [8, 128], strides = [1, 1]} : vector<8x512xf32> to vector<8x128xf32>
    %96 = arith.negf %95 : vector<8x128xf32>
    %97 = math.exp %96 : vector<8x128xf32>
    %cst_26 = arith.constant 1.000000e+00 : f32
    %98 = vector.broadcast %cst_26 : f32 to vector<8x128xf32>
    %99 = arith.addf %98, %97 : vector<8x128xf32>
    %100 = arith.divf %98, %99 : vector<8x128xf32>
    %101 = vector.extract_strided_slice %88 {offsets = [0, 256], sizes = [8, 128], strides = [1, 1]} : vector<8x512xf32> to vector<8x128xf32>
    %102 = math.tanh %101 : vector<8x128xf32>
    %103 = vector.extract_strided_slice %88 {offsets = [0, 384], sizes = [8, 128], strides = [1, 1]} : vector<8x512xf32> to vector<8x128xf32>
    %104 = arith.negf %103 : vector<8x128xf32>
    %105 = math.exp %104 : vector<8x128xf32>
    %cst_27 = arith.constant 1.000000e+00 : f32
    %106 = vector.broadcast %cst_27 : f32 to vector<8x128xf32>
    %107 = arith.addf %106, %105 : vector<8x128xf32>
    %108 = arith.divf %106, %107 : vector<8x128xf32>
    %109 = arith.mulf %100, %81 : vector<8x128xf32>
    %110 = arith.mulf %94, %102 : vector<8x128xf32>
    %111 = arith.addf %109, %110 : vector<8x128xf32>
    %112 = math.tanh %111 : vector<8x128xf32>
    %113 = arith.mulf %108, %112 : vector<8x128xf32>
    %114 = arith.addi %7, %c2_i32 : i32
    %c8_i32_28 = arith.constant 8 : i32
    %115 = arith.cmpi slt, %114, %c8_i32_28 : i32
    %116 = arith.select %115, %113, %80 : vector<8x128xf32>
    %117 = arith.select %115, %111, %81 : vector<8x128xf32>
    %c3_i32 = arith.constant 3 : i32
    %118 = arith.index_cast %c3_i32 : i32 to index
    %c0_29 = arith.constant 0 : index
    %c0_30 = arith.constant 0 : index
    %119 = vector.load %arg2[%118, %c0_29, %c0_30] : memref<8x8x128xbf16, #tpu.memory_space<vmem>>, vector<1x8x128xbf16>
    %120 = vector.shape_cast %119 : vector<1x8x128xbf16> to vector<8x128xbf16>
    %121 = arith.truncf %116 : vector<8x128xf32> to vector<8x128xbf16>
    %122 = tpu.concatenate %120, %121 in 1 : vector<8x128xbf16>, vector<8x128xbf16> -> vector<8x256xbf16>
    %cst_31 = arith.constant dense<0.000000e+00> : vector<8x512xf32>
    %123 = tpu.matmul %122, %3, %cst_31 {dimension_numbers = #tpu.dot_dimension_numbers<[1], [0], [0], [1], [0, 0, 1, 1], [], []>} : vector<8x256xbf16>, vector<256x512xbf16>, vector<8x512xf32> -> vector<8x512xf32>
    %124 = arith.addf %123, %6 : vector<8x512xf32>
    %125 = vector.extract_strided_slice %124 {offsets = [0, 0], sizes = [8, 128], strides = [1, 1]} : vector<8x512xf32> to vector<8x128xf32>
    %126 = arith.negf %125 : vector<8x128xf32>
    %127 = math.exp %126 : vector<8x128xf32>
    %cst_32 = arith.constant 1.000000e+00 : f32
    %128 = vector.broadcast %cst_32 : f32 to vector<8x128xf32>
    %129 = arith.addf %128, %127 : vector<8x128xf32>
    %130 = arith.divf %128, %129 : vector<8x128xf32>
    %131 = vector.extract_strided_slice %124 {offsets = [0, 128], sizes = [8, 128], strides = [1, 1]} : vector<8x512xf32> to vector<8x128xf32>
    %132 = arith.negf %131 : vector<8x128xf32>
    %133 = math.exp %132 : vector<8x128xf32>
    %cst_33 = arith.constant 1.000000e+00 : f32
    %134 = vector.broadcast %cst_33 : f32 to vector<8x128xf32>
    %135 = arith.addf %134, %133 : vector<8x128xf32>
    %136 = arith.divf %134, %135 : vector<8x128xf32>
    %137 = vector.extract_strided_slice %124 {offsets = [0, 256], sizes = [8, 128], strides = [1, 1]} : vector<8x512xf32> to vector<8x128xf32>
    %138 = math.tanh %137 : vector<8x128xf32>
    %139 = vector.extract_strided_slice %124 {offsets = [0, 384], sizes = [8, 128], strides = [1, 1]} : vector<8x512xf32> to vector<8x128xf32>
    %140 = arith.negf %139 : vector<8x128xf32>
    %141 = math.exp %140 : vector<8x128xf32>
    %cst_34 = arith.constant 1.000000e+00 : f32
    %142 = vector.broadcast %cst_34 : f32 to vector<8x128xf32>
    %143 = arith.addf %142, %141 : vector<8x128xf32>
    %144 = arith.divf %142, %143 : vector<8x128xf32>
    %145 = arith.mulf %136, %117 : vector<8x128xf32>
    %146 = arith.mulf %130, %138 : vector<8x128xf32>
    %147 = arith.addf %145, %146 : vector<8x128xf32>
    %148 = math.tanh %147 : vector<8x128xf32>
    %149 = arith.mulf %144, %148 : vector<8x128xf32>
    %150 = arith.addi %7, %c3_i32 : i32
    %c8_i32_35 = arith.constant 8 : i32
    %151 = arith.cmpi slt, %150, %c8_i32_35 : i32
    %152 = arith.select %151, %149, %116 : vector<8x128xf32>
    %153 = arith.select %151, %147, %117 : vector<8x128xf32>
    %c4_i32 = arith.constant 4 : i32
    %154 = arith.index_cast %c4_i32 : i32 to index
    %c0_36 = arith.constant 0 : index
    %c0_37 = arith.constant 0 : index
    %155 = vector.load %arg2[%154, %c0_36, %c0_37] : memref<8x8x128xbf16, #tpu.memory_space<vmem>>, vector<1x8x128xbf16>
    %156 = vector.shape_cast %155 : vector<1x8x128xbf16> to vector<8x128xbf16>
    %157 = arith.truncf %152 : vector<8x128xf32> to vector<8x128xbf16>
    %158 = tpu.concatenate %156, %157 in 1 : vector<8x128xbf16>, vector<8x128xbf16> -> vector<8x256xbf16>
    %cst_38 = arith.constant dense<0.000000e+00> : vector<8x512xf32>
    %159 = tpu.matmul %158, %3, %cst_38 {dimension_numbers = #tpu.dot_dimension_numbers<[1], [0], [0], [1], [0, 0, 1, 1], [], []>} : vector<8x256xbf16>, vector<256x512xbf16>, vector<8x512xf32> -> vector<8x512xf32>
    %160 = arith.addf %159, %6 : vector<8x512xf32>
    %161 = vector.extract_strided_slice %160 {offsets = [0, 0], sizes = [8, 128], strides = [1, 1]} : vector<8x512xf32> to vector<8x128xf32>
    %162 = arith.negf %161 : vector<8x128xf32>
    %163 = math.exp %162 : vector<8x128xf32>
    %cst_39 = arith.constant 1.000000e+00 : f32
    %164 = vector.broadcast %cst_39 : f32 to vector<8x128xf32>
    %165 = arith.addf %164, %163 : vector<8x128xf32>
    %166 = arith.divf %164, %165 : vector<8x128xf32>
    %167 = vector.extract_strided_slice %160 {offsets = [0, 128], sizes = [8, 128], strides = [1, 1]} : vector<8x512xf32> to vector<8x128xf32>
    %168 = arith.negf %167 : vector<8x128xf32>
    %169 = math.exp %168 : vector<8x128xf32>
    %cst_40 = arith.constant 1.000000e+00 : f32
    %170 = vector.broadcast %cst_40 : f32 to vector<8x128xf32>
    %171 = arith.addf %170, %169 : vector<8x128xf32>
    %172 = arith.divf %170, %171 : vector<8x128xf32>
    %173 = vector.extract_strided_slice %160 {offsets = [0, 256], sizes = [8, 128], strides = [1, 1]} : vector<8x512xf32> to vector<8x128xf32>
    %174 = math.tanh %173 : vector<8x128xf32>
    %175 = vector.extract_strided_slice %160 {offsets = [0, 384], sizes = [8, 128], strides = [1, 1]} : vector<8x512xf32> to vector<8x128xf32>
    %176 = arith.negf %175 : vector<8x128xf32>
    %177 = math.exp %176 : vector<8x128xf32>
    %cst_41 = arith.constant 1.000000e+00 : f32
    %178 = vector.broadcast %cst_41 : f32 to vector<8x128xf32>
    %179 = arith.addf %178, %177 : vector<8x128xf32>
    %180 = arith.divf %178, %179 : vector<8x128xf32>
    %181 = arith.mulf %172, %153 : vector<8x128xf32>
    %182 = arith.mulf %166, %174 : vector<8x128xf32>
    %183 = arith.addf %181, %182 : vector<8x128xf32>
    %184 = math.tanh %183 : vector<8x128xf32>
    %185 = arith.mulf %180, %184 : vector<8x128xf32>
    %186 = arith.addi %7, %c4_i32 : i32
    %c8_i32_42 = arith.constant 8 : i32
    %187 = arith.cmpi slt, %186, %c8_i32_42 : i32
    %188 = arith.select %187, %185, %152 : vector<8x128xf32>
    %189 = arith.select %187, %183, %153 : vector<8x128xf32>
    %c5_i32 = arith.constant 5 : i32
    %190 = arith.index_cast %c5_i32 : i32 to index
    %c0_43 = arith.constant 0 : index
    %c0_44 = arith.constant 0 : index
    %191 = vector.load %arg2[%190, %c0_43, %c0_44] : memref<8x8x128xbf16, #tpu.memory_space<vmem>>, vector<1x8x128xbf16>
    %192 = vector.shape_cast %191 : vector<1x8x128xbf16> to vector<8x128xbf16>
    %193 = arith.truncf %188 : vector<8x128xf32> to vector<8x128xbf16>
    %194 = tpu.concatenate %192, %193 in 1 : vector<8x128xbf16>, vector<8x128xbf16> -> vector<8x256xbf16>
    %cst_45 = arith.constant dense<0.000000e+00> : vector<8x512xf32>
    %195 = tpu.matmul %194, %3, %cst_45 {dimension_numbers = #tpu.dot_dimension_numbers<[1], [0], [0], [1], [0, 0, 1, 1], [], []>} : vector<8x256xbf16>, vector<256x512xbf16>, vector<8x512xf32> -> vector<8x512xf32>
    %196 = arith.addf %195, %6 : vector<8x512xf32>
    %197 = vector.extract_strided_slice %196 {offsets = [0, 0], sizes = [8, 128], strides = [1, 1]} : vector<8x512xf32> to vector<8x128xf32>
    %198 = arith.negf %197 : vector<8x128xf32>
    %199 = math.exp %198 : vector<8x128xf32>
    %cst_46 = arith.constant 1.000000e+00 : f32
    %200 = vector.broadcast %cst_46 : f32 to vector<8x128xf32>
    %201 = arith.addf %200, %199 : vector<8x128xf32>
    %202 = arith.divf %200, %201 : vector<8x128xf32>
    %203 = vector.extract_strided_slice %196 {offsets = [0, 128], sizes = [8, 128], strides = [1, 1]} : vector<8x512xf32> to vector<8x128xf32>
    %204 = arith.negf %203 : vector<8x128xf32>
    %205 = math.exp %204 : vector<8x128xf32>
    %cst_47 = arith.constant 1.000000e+00 : f32
    %206 = vector.broadcast %cst_47 : f32 to vector<8x128xf32>
    %207 = arith.addf %206, %205 : vector<8x128xf32>
    %208 = arith.divf %206, %207 : vector<8x128xf32>
    %209 = vector.extract_strided_slice %196 {offsets = [0, 256], sizes = [8, 128], strides = [1, 1]} : vector<8x512xf32> to vector<8x128xf32>
    %210 = math.tanh %209 : vector<8x128xf32>
    %211 = vector.extract_strided_slice %196 {offsets = [0, 384], sizes = [8, 128], strides = [1, 1]} : vector<8x512xf32> to vector<8x128xf32>
    %212 = arith.negf %211 : vector<8x128xf32>
    %213 = math.exp %212 : vector<8x128xf32>
    %cst_48 = arith.constant 1.000000e+00 : f32
    %214 = vector.broadcast %cst_48 : f32 to vector<8x128xf32>
    %215 = arith.addf %214, %213 : vector<8x128xf32>
    %216 = arith.divf %214, %215 : vector<8x128xf32>
    %217 = arith.mulf %208, %189 : vector<8x128xf32>
    %218 = arith.mulf %202, %210 : vector<8x128xf32>
    %219 = arith.addf %217, %218 : vector<8x128xf32>
    %220 = math.tanh %219 : vector<8x128xf32>
    %221 = arith.mulf %216, %220 : vector<8x128xf32>
    %222 = arith.addi %7, %c5_i32 : i32
    %c8_i32_49 = arith.constant 8 : i32
    %223 = arith.cmpi slt, %222, %c8_i32_49 : i32
    %224 = arith.select %223, %221, %188 : vector<8x128xf32>
    %225 = arith.select %223, %219, %189 : vector<8x128xf32>
    %c6_i32 = arith.constant 6 : i32
    %226 = arith.index_cast %c6_i32 : i32 to index
    %c0_50 = arith.constant 0 : index
    %c0_51 = arith.constant 0 : index
    %227 = vector.load %arg2[%226, %c0_50, %c0_51] : memref<8x8x128xbf16, #tpu.memory_space<vmem>>, vector<1x8x128xbf16>
    %228 = vector.shape_cast %227 : vector<1x8x128xbf16> to vector<8x128xbf16>
    %229 = arith.truncf %224 : vector<8x128xf32> to vector<8x128xbf16>
    %230 = tpu.concatenate %228, %229 in 1 : vector<8x128xbf16>, vector<8x128xbf16> -> vector<8x256xbf16>
    %cst_52 = arith.constant dense<0.000000e+00> : vector<8x512xf32>
    %231 = tpu.matmul %230, %3, %cst_52 {dimension_numbers = #tpu.dot_dimension_numbers<[1], [0], [0], [1], [0, 0, 1, 1], [], []>} : vector<8x256xbf16>, vector<256x512xbf16>, vector<8x512xf32> -> vector<8x512xf32>
    %232 = arith.addf %231, %6 : vector<8x512xf32>
    %233 = vector.extract_strided_slice %232 {offsets = [0, 0], sizes = [8, 128], strides = [1, 1]} : vector<8x512xf32> to vector<8x128xf32>
    %234 = arith.negf %233 : vector<8x128xf32>
    %235 = math.exp %234 : vector<8x128xf32>
    %cst_53 = arith.constant 1.000000e+00 : f32
    %236 = vector.broadcast %cst_53 : f32 to vector<8x128xf32>
    %237 = arith.addf %236, %235 : vector<8x128xf32>
    %238 = arith.divf %236, %237 : vector<8x128xf32>
    %239 = vector.extract_strided_slice %232 {offsets = [0, 128], sizes = [8, 128], strides = [1, 1]} : vector<8x512xf32> to vector<8x128xf32>
    %240 = arith.negf %239 : vector<8x128xf32>
    %241 = math.exp %240 : vector<8x128xf32>
    %cst_54 = arith.constant 1.000000e+00 : f32
    %242 = vector.broadcast %cst_54 : f32 to vector<8x128xf32>
    %243 = arith.addf %242, %241 : vector<8x128xf32>
    %244 = arith.divf %242, %243 : vector<8x128xf32>
    %245 = vector.extract_strided_slice %232 {offsets = [0, 256], sizes = [8, 128], strides = [1, 1]} : vector<8x512xf32> to vector<8x128xf32>
    %246 = math.tanh %245 : vector<8x128xf32>
    %247 = vector.extract_strided_slice %232 {offsets = [0, 384], sizes = [8, 128], strides = [1, 1]} : vector<8x512xf32> to vector<8x128xf32>
    %248 = arith.negf %247 : vector<8x128xf32>
    %249 = math.exp %248 : vector<8x128xf32>
    %cst_55 = arith.constant 1.000000e+00 : f32
    %250 = vector.broadcast %cst_55 : f32 to vector<8x128xf32>
    %251 = arith.addf %250, %249 : vector<8x128xf32>
    %252 = arith.divf %250, %251 : vector<8x128xf32>
    %253 = arith.mulf %244, %225 : vector<8x128xf32>
    %254 = arith.mulf %238, %246 : vector<8x128xf32>
    %255 = arith.addf %253, %254 : vector<8x128xf32>
    %256 = math.tanh %255 : vector<8x128xf32>
    %257 = arith.mulf %252, %256 : vector<8x128xf32>
    %258 = arith.addi %7, %c6_i32 : i32
    %c8_i32_56 = arith.constant 8 : i32
    %259 = arith.cmpi slt, %258, %c8_i32_56 : i32
    %260 = arith.select %259, %257, %224 : vector<8x128xf32>
    %261 = arith.select %259, %255, %225 : vector<8x128xf32>
    %c7_i32 = arith.constant 7 : i32
    %262 = arith.index_cast %c7_i32 : i32 to index
    %c0_57 = arith.constant 0 : index
    %c0_58 = arith.constant 0 : index
    %263 = vector.load %arg2[%262, %c0_57, %c0_58] : memref<8x8x128xbf16, #tpu.memory_space<vmem>>, vector<1x8x128xbf16>
    %264 = vector.shape_cast %263 : vector<1x8x128xbf16> to vector<8x128xbf16>
    %265 = arith.truncf %260 : vector<8x128xf32> to vector<8x128xbf16>
    %266 = tpu.concatenate %264, %265 in 1 : vector<8x128xbf16>, vector<8x128xbf16> -> vector<8x256xbf16>
    %cst_59 = arith.constant dense<0.000000e+00> : vector<8x512xf32>
    %267 = tpu.matmul %266, %3, %cst_59 {dimension_numbers = #tpu.dot_dimension_numbers<[1], [0], [0], [1], [0, 0, 1, 1], [], []>} : vector<8x256xbf16>, vector<256x512xbf16>, vector<8x512xf32> -> vector<8x512xf32>
    %268 = arith.addf %267, %6 : vector<8x512xf32>
    %269 = vector.extract_strided_slice %268 {offsets = [0, 0], sizes = [8, 128], strides = [1, 1]} : vector<8x512xf32> to vector<8x128xf32>
    %270 = arith.negf %269 : vector<8x128xf32>
    %271 = math.exp %270 : vector<8x128xf32>
    %cst_60 = arith.constant 1.000000e+00 : f32
    %272 = vector.broadcast %cst_60 : f32 to vector<8x128xf32>
    %273 = arith.addf %272, %271 : vector<8x128xf32>
    %274 = arith.divf %272, %273 : vector<8x128xf32>
    %275 = vector.extract_strided_slice %268 {offsets = [0, 128], sizes = [8, 128], strides = [1, 1]} : vector<8x512xf32> to vector<8x128xf32>
    %276 = arith.negf %275 : vector<8x128xf32>
    %277 = math.exp %276 : vector<8x128xf32>
    %cst_61 = arith.constant 1.000000e+00 : f32
    %278 = vector.broadcast %cst_61 : f32 to vector<8x128xf32>
    %279 = arith.addf %278, %277 : vector<8x128xf32>
    %280 = arith.divf %278, %279 : vector<8x128xf32>
    %281 = vector.extract_strided_slice %268 {offsets = [0, 256], sizes = [8, 128], strides = [1, 1]} : vector<8x512xf32> to vector<8x128xf32>
    %282 = math.tanh %281 : vector<8x128xf32>
    %283 = vector.extract_strided_slice %268 {offsets = [0, 384], sizes = [8, 128], strides = [1, 1]} : vector<8x512xf32> to vector<8x128xf32>
    %284 = arith.negf %283 : vector<8x128xf32>
    %285 = math.exp %284 : vector<8x128xf32>
    %cst_62 = arith.constant 1.000000e+00 : f32
    %286 = vector.broadcast %cst_62 : f32 to vector<8x128xf32>
    %287 = arith.addf %286, %285 : vector<8x128xf32>
    %288 = arith.divf %286, %287 : vector<8x128xf32>
    %289 = arith.mulf %280, %261 : vector<8x128xf32>
    %290 = arith.mulf %274, %282 : vector<8x128xf32>
    %291 = arith.addf %289, %290 : vector<8x128xf32>
    %292 = math.tanh %291 : vector<8x128xf32>
    %293 = arith.mulf %288, %292 : vector<8x128xf32>
    %294 = arith.addi %7, %c7_i32 : i32
    %c8_i32_63 = arith.constant 8 : i32
    %295 = arith.cmpi slt, %294, %c8_i32_63 : i32
    %296 = arith.select %295, %293, %260 : vector<8x128xf32>
    %297 = arith.select %295, %291, %261 : vector<8x128xf32>
    %c8_i32_64 = arith.constant 8 : i32
    %c0_65 = arith.constant 0 : index
    %c0_66 = arith.constant 0 : index
    %298 = vector.load %arg6[%c0_65, %c0_66] : memref<8x128xf32, #tpu.memory_space<vmem>>, vector<8x128xf32>
    tpu.vector_store %arg6[%c0_65, %c0_66], %296 {strides = array<i32>} : memref<8x128xf32, #tpu.memory_space<vmem>>, vector<8x128xf32>,
    %c0_67 = arith.constant 0 : index
    %c0_68 = arith.constant 0 : index
    %299 = vector.load %arg7[%c0_67, %c0_68] : memref<8x128xf32, #tpu.memory_space<vmem>>, vector<8x128xf32>
    tpu.vector_store %arg7[%c0_67, %c0_68], %297 {strides = array<i32>} : memref<8x128xf32, #tpu.memory_space<vmem>>, vector<8x128xf32>,
    %c0_i32_69 = arith.constant 0 : i32
    %300 = arith.cmpi eq, %arg1, %c0_i32_69 : i32
    %301 = arith.extui %300 : i1 to i32
    %c0_i32_70 = arith.constant 0 : i32
    %302 = arith.cmpi ne, %301, %c0_i32_70 : i32
    scf.if %302 {
      %c0_71 = arith.constant 0 : index
      %c0_72 = arith.constant 0 : index
      %303 = vector.load %arg5[%c0_71, %c0_72] : memref<8x128xf32, #tpu.memory_space<vmem>>, vector<8x128xf32>
      tpu.vector_store %arg5[%c0_71, %c0_72], %296 {strides = array<i32>} : memref<8x128xf32, #tpu.memory_space<vmem>>, vector<8x128xf32>,
    } else {
    }
    return
  }
  func.func @transform_0(%arg0: i32, %arg1: i32) -> (i32, i32, i32) {
    %c0_i32 = arith.constant 0 : i32
    %c0_i32_0 = arith.constant 0 : i32
    return %arg1, %arg0, %c0_i32 : i32, i32, i32
  }
  func.func @transform_1(%arg0: i32, %arg1: i32) -> (i32, i32) {
    %c0_i32 = arith.constant 0 : i32
    %c0_i32_0 = arith.constant 0 : i32
    %c0_i32_1 = arith.constant 0 : i32
    return %c0_i32, %c0_i32_0 : i32, i32
  }
  func.func @transform_2(%arg0: i32, %arg1: i32) -> (i32, i32) {
    %c0_i32 = arith.constant 0 : i32
    %c0_i32_0 = arith.constant 0 : i32
    %c0_i32_1 = arith.constant 0 : i32
    return %c0_i32, %c0_i32_0 : i32, i32
  }
  func.func @transform_3(%arg0: i32, %arg1: i32) -> (i32, i32) {
    %c0_i32 = arith.constant 0 : i32
    %c0_i32_0 = arith.constant 0 : i32
    return %arg0, %c0_i32 : i32, i32
  }
}

</mosaic_0001>

<llo_original>
// kernel: tpu_custom_call.1
$region0: #{tpu_custom_call.1}
  #allocation0 [shape = 'u32[]', space=smem, size = 0x4, offset = 0x4, fixed_abs, tag = 'smem constant byte address 0x4 - core index']
  #allocation1 [shape = 'u32[144,128]{1,0:T(1,128)}', space=vmem, size = 0x12000, scoped, tag = 'internal scratch']
  #allocation2 [shape = 'f32[8,128]{1,0:T(8,128)}', space=vmem, size = 0x1000, scoped, tag = 'scratch operand']
  #allocation3 [shape = 'f32[8,128]{1,0:T(8,128)}', space=vmem, size = 0x1000, scoped, tag = 'scratch operand']
  %s0 = inlined_call_operand.hbm [shape: bf16[8,8,128], index: 0, kind: input, shape index: {}]
  %s1 = inlined_call_operand.hbm [shape: bf16[256,512], index: 1, kind: input, shape index: {}]
  %s2 = inlined_call_operand.vmem [shape: f32[1,512], index: 2, kind: input, shape index: {}]
  %s3 = inlined_call_operand.hbm [shape: f32[8,128], index: 3, kind: output, shape index: {}]
  %s4 = sld [smem:[#allocation0]]
  $region38: #{tpu_custom_call.1} parent=0
    _
  %s6 = ssub.s32 1, %s4
  %s7 = scalar_select 0, %s6, %s4
  $region1: #{tpu_custom_call.1} parent=0
    #allocation4 [shape = 'u8[16384]{0}', space=vmem, size = 0x4000, scoped, tag = 'input window, operand 0, single buffered']
    #allocation5 [shape = 's32[1]{0}', space=sflag, size = 0x4, scoped, tag = 'scoped memory for tpu_custom_call.1']
    #allocation6 [shape = 's32[1]{0}', space=sflag, size = 0x4, scoped, tag = 'scoped memory for tpu_custom_call.1']
    #allocation7 [shape = 'u8[262144]{0}', space=vmem, size = 0x40000, scoped, tag = 'input window, operand 1, single buffered']
    #allocation8 [shape = 's32[1]{0}', space=sflag, size = 0x4, scoped, tag = 'scoped memory for tpu_custom_call.1']
    #allocation9 [shape = 'u8[4096]{0}', space=vmem, size = 0x1000, scoped, tag = 'output window, operand 0, single buffered']
    %8 = vsyncpa [#allocation5], 0
    %9 = vsyncpa [#allocation8], 0
    %10 = vsyncpa [#allocation6], 0
    // Predicated region
    $region2: #{tpu_custom_call.1} parent=1 // pred_check
      _
    $region3: #{tpu_custom_call.1} parent=1 // pred_check_branch
      %12 = sbr.rel (0) target = $region5
    $region4: #{tpu_custom_call.1} parent=1 // pred_region
      %s14 = ssub.s32 512, 512
      %15 = vsyncadd [#allocation5], %s14
      %s16 = sshll.u32 [#allocation4], 4
      %s17 = int_to_ptr.vmem [resolvable:$true] %s16
      %22 = dma.hbm_to_vmem [thread:$0]  %s0, 512, %s17, [#allocation5], 64, 64, 4
    $region5: #{tpu_custom_call.1} parent=1 // pred_fallthru
      _
    // Predicated region
    $region6: #{tpu_custom_call.1} parent=1 // pred_check
      _
    $region7: #{tpu_custom_call.1} parent=1 // pred_check_branch
      %24 = sbr.rel (0) target = $region9
    $region8: #{tpu_custom_call.1} parent=1 // pred_region
      %s26 = ssub.s32 8192, 8192
      %27 = vsyncadd [#allocation8], %s26
      %s28 = sshll.u32 [#allocation7], 4
      %s29 = int_to_ptr.vmem [resolvable:$true] %s28
      %34 = dma.hbm_to_vmem [thread:$0]  %s1, 8192, %s29, [#allocation8], 256, 256, 16
    $region9: #{tpu_custom_call.1} parent=1 // pred_fallthru
      _
    // Predicated region
    $region10: #{tpu_custom_call.1} parent=1 // pred_check
      _
    $region11: #{tpu_custom_call.1} parent=1 // pred_check_branch
      %36 = sbr.rel (0) target = $region13
    $region12: #{tpu_custom_call.1} parent=1 // pred_region
      _
    $region13: #{tpu_custom_call.1} parent=1 // pred_fallthru
      _
    // Predicated region
    $region14: #{tpu_custom_call.1} parent=1 // pred_check
      _
    $region15: #{tpu_custom_call.1} parent=1 // pred_check_branch
      %38 = sbr.rel (0) target = $region17
    $region16: #{tpu_custom_call.1} parent=1 // pred_region
      %39 = dma.done [#allocation5], 512
    $region17: #{tpu_custom_call.1} parent=1 // pred_fallthru
      _
    // Predicated region
    $region18: #{tpu_custom_call.1} parent=1 // pred_check
      _
    $region19: #{tpu_custom_call.1} parent=1 // pred_check_branch
      %41 = sbr.rel (0) target = $region21
    $region20: #{tpu_custom_call.1} parent=1 // pred_region
      %42 = dma.done [#allocation8], 8192
    $region21: #{tpu_custom_call.1} parent=1 // pred_fallthru
      _
    %p43 = scmp.eq.s32.totalorder 0, 0
    // Predicated region
    $region22: #{tpu_custom_call.1} parent=1 // pred_check
      %p44 = pneg %p43
    $region23: #{tpu_custom_call.1} parent=1 // pred_check_branch
      %46 = sbr.rel (%p44) target = $region25
    $region24: #{tpu_custom_call.1} parent=1 // pred_region
      %47 = vst [vmem:[#allocation2] sm:$0xff] 0.0
      %48 = vst [vmem:[#allocation3] sm:$0xff] 0.0
    $region25: #{tpu_custom_call.1} parent=1 // pred_fallthru
      _
    %v49 = vld [vmem:[#allocation7] sm:$0xff]
    %v50 = vld [vmem:[#allocation7 + $0x8] sm:$0xff]
    %v51 = vld [vmem:[#allocation7 + $0x10] sm:$0xff]
    %v52 = vld [vmem:[#allocation7 + $0x18] sm:$0xff]
    %v53 = vld [vmem:[#allocation7 + $0x20] sm:$0xff]
    %v54 = vld [vmem:[#allocation7 + $0x28] sm:$0xff]
    %v55 = vld [vmem:[#allocation7 + $0x30] sm:$0xff]
    %v56 = vld [vmem:[#allocation7 + $0x38] sm:$0xff]
    %v57 = vld [vmem:[#allocation7 + $0x40] sm:$0xff]
    %v58 = vld [vmem:[#allocation7 + $0x48] sm:$0xff]
    %v59 = vld [vmem:[#allocation7 + $0x50] sm:$0xff]
    %v60 = vld [vmem:[#allocation7 + $0x58] sm:$0xff]
    %v61 = vld [vmem:[#allocation7 + $0x60] sm:$0xff]
    %v62 = vld [vmem:[#allocation7 + $0x68] sm:$0xff]
    %v63 = vld [vmem:[#allocation7 + $0x70] sm:$0xff]
    %v64 = vld [vmem:[#allocation7 + $0x78] sm:$0xff]
    %v65 = vld [vmem:[#allocation7 + $0x80] sm:$0xff]
    %v66 = vld [vmem:[#allocation7 + $0x88] sm:$0xff]
    %v67 = vld [vmem:[#allocation7 + $0x90] sm:$0xff]
    %v68 = vld [vmem:[#allocation7 + $0x98] sm:$0xff]
    %v69 = vld [vmem:[#allocation7 + $0xa0] sm:$0xff]
    %v70 = vld [vmem:[#allocation7 + $0xa8] sm:$0xff]
    %v71 = vld [vmem:[#allocation7 + $0xb0] sm:$0xff]
    %v72 = vld [vmem:[#allocation7 + $0xb8] sm:$0xff]
    %v73 = vld [vmem:[#allocation7 + $0xc0] sm:$0xff]
    %v74 = vld [vmem:[#allocation7 + $0xc8] sm:$0xff]
    %v75 = vld [vmem:[#allocation7 + $0xd0] sm:$0xff]
    %v76 = vld [vmem:[#allocation7 + $0xd8] sm:$0xff]
    %v77 = vld [vmem:[#allocation7 + $0xe0] sm:$0xff]
    %v78 = vld [vmem:[#allocation7 + $0xe8] sm:$0xff]
    %v79 = vld [vmem:[#allocation7 + $0xf0] sm:$0xff]
    %v80 = vld [vmem:[#allocation7 + $0xf8] sm:$0xff]
    %v81 = vld [vmem:[#allocation7 + $0x100] sm:$0xff]
    %v82 = vld [vmem:[#allocation7 + $0x108] sm:$0xff]
    %v83 = vld [vmem:[#allocation7 + $0x110] sm:$0xff]
    %v84 = vld [vmem:[#allocation7 + $0x118] sm:$0xff]
    %v85 = vld [vmem:[#allocation7 + $0x120] sm:$0xff]
    %v86 = vld [vmem:[#allocation7 + $0x128] sm:$0xff]
    %v87 = vld [vmem:[#allocation7 + $0x130] sm:$0xff]
    %v88 = vld [vmem:[#allocation7 + $0x138] sm:$0xff]
    %v89 = vld [vmem:[#allocation7 + $0x140] sm:$0xff]
    %v90 = vld [vmem:[#allocation7 + $0x148] sm:$0xff]
    %v91 = vld [vmem:[#allocation7 + $0x150] sm:$0xff]
    %v92 = vld [vmem:[#allocation7 + $0x158] sm:$0xff]
    %v93 = vld [vmem:[#allocation7 + $0x160] sm:$0xff]
    %v94 = vld [vmem:[#allocation7 + $0x168] sm:$0xff]
    %v95 = vld [vmem:[#allocation7 + $0x170] sm:$0xff]
    %v96 = vld [vmem:[#allocation7 + $0x178] sm:$0xff]
    %v97 = vld [vmem:[#allocation7 + $0x180] sm:$0xff]
    %v98 = vld [vmem:[#allocation7 + $0x188] sm:$0xff]
    %v99 = vld [vmem:[#allocation7 + $0x190] sm:$0xff]
    %v100 = vld [vmem:[#allocation7 + $0x198] sm:$0xff]
    %v101 = vld [vmem:[#allocation7 + $0x1a0] sm:$0xff]
    %v102 = vld [vmem:[#allocation7 + $0x1a8] sm:$0xff]
    %v103 = vld [vmem:[#allocation7 + $0x1b0] sm:$0xff]
    %v104 = vld [vmem:[#allocation7 + $0x1b8] sm:$0xff]
    %v105 = vld [vmem:[#allocation7 + $0x1c0] sm:$0xff]
    %v106 = vld [vmem:[#allocation7 + $0x1c8] sm:$0xff]
    %v107 = vld [vmem:[#allocation7 + $0x1d0] sm:$0xff]
    %v108 = vld [vmem:[#allocation7 + $0x1d8] sm:$0xff]
    %v109 = vld [vmem:[#allocation7 + $0x1e0] sm:$0xff]
    %v110 = vld [vmem:[#allocation7 + $0x1e8] sm:$0xff]
    %v111 = vld [vmem:[#allocation7 + $0x1f0] sm:$0xff]
    %v112 = vld [vmem:[#allocation7 + $0x1f8] sm:$0xff]
    %v113 = vld [vmem:[%s2] sm:$0xf]
    %v115 = vlaneseq
    %v116 = vshrl.u32 %v115, 7
    %v117 = vsub.s32 0, %v116
    %v118 = vrot.slane %v113, %v117
    %v119 = vlaneseq
    %v120 = vshrl.u32 %v119, 7
    %v121 = vsub.s32 1, %v120
    %v122 = vrot.slane %v113, %v121
    %v123 = vlaneseq
    %v124 = vshrl.u32 %v123, 7
    %v125 = vsub.s32 2, %v124
    %v126 = vrot.slane %v113, %v125
    %v127 = vlaneseq
    %v128 = vshrl.u32 %v127, 7
    %v129 = vsub.s32 3, %v128
    %v130 = vrot.slane %v113, %v129
    %s135 = smul.u32 0, 8
    %v136 = vld [vmem:[#allocation2] sm:$0xff]
    %v137 = vld [vmem:[#allocation3] sm:$0xff]
    %v138 = vld [vmem:[#allocation4] sm:$0xf]
    %v139 = vpack.c.bf16 %v136, %v136
    %v204 = vunpack.c.l.b16 %v49
    %v205 = vunpack.c.h.b16 %v49
    %v206 = vunpack.c.l.b16 %v50
    %v207 = vunpack.c.h.b16 %v50
    %v208 = vunpack.c.l.b16 %v51
    %v209 = vunpack.c.h.b16 %v51
    %v210 = vunpack.c.l.b16 %v52
    %v211 = vunpack.c.h.b16 %v52
    %v212 = vunpack.c.l.b16 %v53
    %v213 = vunpack.c.h.b16 %v53
    %v214 = vunpack.c.l.b16 %v54
    %v215 = vunpack.c.h.b16 %v54
    %v216 = vunpack.c.l.b16 %v55
    %v217 = vunpack.c.h.b16 %v55
    %v218 = vunpack.c.l.b16 %v56
    %v219 = vunpack.c.h.b16 %v56
    %v220 = vunpack.c.l.b16 %v57
    %v221 = vunpack.c.h.b16 %v57
    %v222 = vunpack.c.l.b16 %v58
    %v223 = vunpack.c.h.b16 %v58
    %v224 = vunpack.c.l.b16 %v59
    %v225 = vunpack.c.h.b16 %v59
    %v226 = vunpack.c.l.b16 %v60
    %v227 = vunpack.c.h.b16 %v60
    %v228 = vunpack.c.l.b16 %v61
    %v229 = vunpack.c.h.b16 %v61
    %v230 = vunpack.c.l.b16 %v62
    %v231 = vunpack.c.h.b16 %v62
    %v232 = vunpack.c.l.b16 %v63
    %v233 = vunpack.c.h.b16 %v63
    %v234 = vunpack.c.l.b16 %v64
    %v235 = vunpack.c.h.b16 %v64
    %v236 = vunpack.c.l.b16 %v65
    %v237 = vunpack.c.h.b16 %v65
    %v238 = vunpack.c.l.b16 %v66
    %v239 = vunpack.c.h.b16 %v66
    %v240 = vunpack.c.l.b16 %v67
    %v241 = vunpack.c.h.b16 %v67
    %v242 = vunpack.c.l.b16 %v68
    %v243 = vunpack.c.h.b16 %v68
    %v244 = vunpack.c.l.b16 %v69
    %v245 = vunpack.c.h.b16 %v69
    %v246 = vunpack.c.l.b16 %v70
    %v247 = vunpack.c.h.b16 %v70
    %v248 = vunpack.c.l.b16 %v71
    %v249 = vunpack.c.h.b16 %v71
    %v250 = vunpack.c.l.b16 %v72
    %v251 = vunpack.c.h.b16 %v72
    %v252 = vunpack.c.l.b16 %v73
    %v253 = vunpack.c.h.b16 %v73
    %v254 = vunpack.c.l.b16 %v74
    %v255 = vunpack.c.h.b16 %v74
    %v256 = vunpack.c.l.b16 %v75
    %v257 = vunpack.c.h.b16 %v75
    %v258 = vunpack.c.l.b16 %v76
    %v259 = vunpack.c.h.b16 %v76
    %v260 = vunpack.c.l.b16 %v77
    %v261 = vunpack.c.h.b16 %v77
    %v262 = vunpack.c.l.b16 %v78
    %v263 = vunpack.c.h.b16 %v78
    %v264 = vunpack.c.l.b16 %v79
    %v265 = vunpack.c.h.b16 %v79
    %v266 = vunpack.c.l.b16 %v80
    %v267 = vunpack.c.h.b16 %v80
    %v268 = vunpack.c.l.b16 %v81
    %v269 = vunpack.c.h.b16 %v81
    %v270 = vunpack.c.l.b16 %v82
    %v271 = vunpack.c.h.b16 %v82
    %v272 = vunpack.c.l.b16 %v83
    %v273 = vunpack.c.h.b16 %v83
    %v274 = vunpack.c.l.b16 %v84
    %v275 = vunpack.c.h.b16 %v84
    %v276 = vunpack.c.l.b16 %v85
    %v277 = vunpack.c.h.b16 %v85
    %v278 = vunpack.c.l.b16 %v86
    %v279 = vunpack.c.h.b16 %v86
    %v280 = vunpack.c.l.b16 %v87
    %v281 = vunpack.c.h.b16 %v87
    %v282 = vunpack.c.l.b16 %v88
    %v283 = vunpack.c.h.b16 %v88
    %v284 = vunpack.c.l.b16 %v89
    %v285 = vunpack.c.h.b16 %v89
    %v286 = vunpack.c.l.b16 %v90
    %v287 = vunpack.c.h.b16 %v90
    %v288 = vunpack.c.l.b16 %v91
    %v289 = vunpack.c.h.b16 %v91
    %v290 = vunpack.c.l.b16 %v92
    %v291 = vunpack.c.h.b16 %v92
    %v292 = vunpack.c.l.b16 %v93
    %v293 = vunpack.c.h.b16 %v93
    %v294 = vunpack.c.l.b16 %v94
    %v295 = vunpack.c.h.b16 %v94
    %v296 = vunpack.c.l.b16 %v95
    %v297 = vunpack.c.h.b16 %v95
    %v298 = vunpack.c.l.b16 %v96
    %v299 = vunpack.c.h.b16 %v96
    %v300 = vunpack.c.l.b16 %v97
    %v301 = vunpack.c.h.b16 %v97
    %v302 = vunpack.c.l.b16 %v98
    %v303 = vunpack.c.h.b16 %v98
    %v304 = vunpack.c.l.b16 %v99
    %v305 = vunpack.c.h.b16 %v99
    %v306 = vunpack.c.l.b16 %v100
    %v307 = vunpack.c.h.b16 %v100
    %v308 = vunpack.c.l.b16 %v101
    %v309 = vunpack.c.h.b16 %v101
    %v310 = vunpack.c.l.b16 %v102
    %v311 = vunpack.c.h.b16 %v102
    %v312 = vunpack.c.l.b16 %v103
    %v313 = vunpack.c.h.b16 %v103
    %v314 = vunpack.c.l.b16 %v104
    %v315 = vunpack.c.h.b16 %v104
    %v316 = vunpack.c.l.b16 %v105
    %v317 = vunpack.c.h.b16 %v105
    %v318 = vunpack.c.l.b16 %v106
    %v319 = vunpack.c.h.b16 %v106
    %v320 = vunpack.c.l.b16 %v107
    %v321 = vunpack.c.h.b16 %v107
    %v322 = vunpack.c.l.b16 %v108
    %v323 = vunpack.c.h.b16 %v108
    %v324 = vunpack.c.l.b16 %v109
    %v325 = vunpack.c.h.b16 %v109
    %v326 = vunpack.c.l.b16 %v110
    %v327 = vunpack.c.h.b16 %v110
    %v328 = vunpack.c.l.b16 %v111
    %v329 = vunpack.c.h.b16 %v111
    %v330 = vunpack.c.l.b16 %v112
    %v331 = vunpack.c.h.b16 %v112
    %v332 = vpack.c.b16 %v208, %v204
    %v333 = vpack.c.b16 %v209, %v205
    %v334 = vpack.c.b16 %v210, %v206
    %v335 = vpack.c.b16 %v211, %v207
    %v336 = vpack.c.b16 %v216, %v212
    %v337 = vpack.c.b16 %v217, %v213
    %v338 = vpack.c.b16 %v218, %v214
    %v339 = vpack.c.b16 %v219, %v215
    %v340 = vpack.c.b16 %v224, %v220
    %v341 = vpack.c.b16 %v225, %v221
    %v342 = vpack.c.b16 %v226, %v222
    %v343 = vpack.c.b16 %v227, %v223
    %v344 = vpack.c.b16 %v232, %v228
    %v345 = vpack.c.b16 %v233, %v229
    %v346 = vpack.c.b16 %v234, %v230
    %v347 = vpack.c.b16 %v235, %v231
    %v348 = vpack.c.b16 %v240, %v236
    %v349 = vpack.c.b16 %v241, %v237
    %v350 = vpack.c.b16 %v242, %v238
    %v351 = vpack.c.b16 %v243, %v239
    %v352 = vpack.c.b16 %v248, %v244
    %v353 = vpack.c.b16 %v249, %v245
    %v354 = vpack.c.b16 %v250, %v246
    %v355 = vpack.c.b16 %v251, %v247
    %v356 = vpack.c.b16 %v256, %v252
    %v357 = vpack.c.b16 %v257, %v253
    %v358 = vpack.c.b16 %v258, %v254
    %v359 = vpack.c.b16 %v259, %v255
    %v360 = vpack.c.b16 %v264, %v260
    %v361 = vpack.c.b16 %v265, %v261
    %v362 = vpack.c.b16 %v266, %v262
    %v363 = vpack.c.b16 %v267, %v263
    %v364 = vpack.c.b16 %v272, %v268
    %v365 = vpack.c.b16 %v273, %v269
    %v366 = vpack.c.b16 %v274, %v270
    %v367 = vpack.c.b16 %v275, %v271
    %v368 = vpack.c.b16 %v280, %v276
    %v369 = vpack.c.b16 %v281, %v277
    %v370 = vpack.c.b16 %v282, %v278
    %v371 = vpack.c.b16 %v283, %v279
    %v372 = vpack.c.b16 %v288, %v284
    %v373 = vpack.c.b16 %v289, %v285
    %v374 = vpack.c.b16 %v290, %v286
    %v375 = vpack.c.b16 %v291, %v287
    %v376 = vpack.c.b16 %v296, %v292
    %v377 = vpack.c.b16 %v297, %v293
    %v378 = vpack.c.b16 %v298, %v294
    %v379 = vpack.c.b16 %v299, %v295
    %v380 = vpack.c.b16 %v304, %v300
    %v381 = vpack.c.b16 %v305, %v301
    %v382 = vpack.c.b16 %v306, %v302
    %v383 = vpack.c.b16 %v307, %v303
    %v384 = vpack.c.b16 %v312, %v308
    %v385 = vpack.c.b16 %v313, %v309
    %v386 = vpack.c.b16 %v314, %v310
    %v387 = vpack.c.b16 %v315, %v311
    %v388 = vpack.c.b16 %v320, %v316
    %v389 = vpack.c.b16 %v321, %v317
    %v390 = vpack.c.b16 %v322, %v318
    %v391 = vpack.c.b16 %v323, %v319
    %v392 = vpack.c.b16 %v328, %v324
    %v393 = vpack.c.b16 %v329, %v325
    %v394 = vpack.c.b16 %v330, %v326
    %v395 = vpack.c.b16 %v331, %v327
    %460 = vmatprep.subr.bf16.mxu0 %v333
    %461 = vmatpush1.bf16.msra.mxu0 %v332
    %462 = vmatprep.subr.bf16.mxu0 %v337
    %463 = vmatpush1.bf16.msra.mxu0 %v336
    %464 = vmatprep.subr.bf16.mxu0 %v341
    %465 = vmatpush1.bf16.msra.mxu0 %v340
    %466 = vmatprep.subr.bf16.mxu0 %v345
    %467 = vmatpush1.bf16.msra.mxu0 %v344
    %468 = vmatprep.subr.bf16.mxu0 %v349
    %469 = vmatpush1.bf16.msra.mxu0 %v348
    %470 = vmatprep.subr.bf16.mxu0 %v353
    %471 = vmatpush1.bf16.msra.mxu0 %v352
    %472 = vmatprep.subr.bf16.mxu0 %v357
    %473 = vmatpush1.bf16.msra.mxu0 %v356
    %474 = vmatprep.subr.bf16.mxu0 %v361
    %475 = vmatpush1.bf16.msra.mxu0 %v360
    %476 = vmatprep.subr.bf16.mxu0 %v365
    %477 = vmatpush1.bf16.msra.mxu0 %v364
    %478 = vmatprep.subr.bf16.mxu0 %v369
    %479 = vmatpush1.bf16.msra.mxu0 %v368
    %480 = vmatprep.subr.bf16.mxu0 %v373
    %481 = vmatpush1.bf16.msra.mxu0 %v372
    %482 = vmatprep.subr.bf16.mxu0 %v377
    %483 = vmatpush1.bf16.msra.mxu0 %v376
    %484 = vmatprep.subr.bf16.mxu0 %v381
    %485 = vmatpush1.bf16.msra.mxu0 %v380
    %486 = vmatprep.subr.bf16.mxu0 %v385
    %487 = vmatpush1.bf16.msra.mxu0 %v384
    %488 = vmatprep.subr.bf16.mxu0 %v389
    %489 = vmatpush1.bf16.msra.mxu0 %v388
    %490 = vmatprep.subr.bf16.mxu0 %v393
    %491 = vmatpush1.bf16.msra.mxu0 %v392
    %492 = vmatprep.mubr.bf16.mxu0 %v139
    %493 = vmatmul.mubr.bf16.gmra.mrb[0].mxu0 %v138
    %v494 = vpop.f32.mrb[0].mxu0
    %v495 = vadd.f32 %v118, %v494
    %v496 = vpop.f32.mrb[0].mxu0
    %v497 = vadd.f32 %v122, %v496
    %v498 = vpop.f32.mrb[0].mxu0
    %v499 = vpop.f32.mrb[0].mxu0
    %500 = vdwg.mxu0
    %501 = vmatprep.subr.bf16.mxu0 %v335
    %502 = vmatpush1.bf16.msra.mxu0 %v334
    %503 = vmatprep.subr.bf16.mxu0 %v339
    %504 = vmatpush1.bf16.msra.mxu0 %v338
    %505 = vmatprep.subr.bf16.mxu0 %v343
    %506 = vmatpush1.bf16.msra.mxu0 %v342
    %507 = vmatprep.subr.bf16.mxu0 %v347
    %508 = vmatpush1.bf16.msra.mxu0 %v346
    %509 = vmatprep.subr.bf16.mxu0 %v351
    %510 = vmatpush1.bf16.msra.mxu0 %v350
    %511 = vmatprep.subr.bf16.mxu0 %v355
    %512 = vmatpush1.bf16.msra.mxu0 %v354
    %513 = vmatprep.subr.bf16.mxu0 %v359
    %514 = vmatpush1.bf16.msra.mxu0 %v358
    %515 = vmatprep.subr.bf16.mxu0 %v363
    %516 = vmatpush1.bf16.msra.mxu0 %v362
    %517 = vmatprep.subr.bf16.mxu0 %v367
    %518 = vmatpush1.bf16.msra.mxu0 %v366
    %519 = vmatprep.subr.bf16.mxu0 %v371
    %520 = vmatpush1.bf16.msra.mxu0 %v370
    %521 = vmatprep.subr.bf16.mxu0 %v375
    %522 = vmatpush1.bf16.msra.mxu0 %v374
    %523 = vmatprep.subr.bf16.mxu0 %v379
    %524 = vmatpush1.bf16.msra.mxu0 %v378
    %525 = vmatprep.subr.bf16.mxu0 %v383
    %526 = vmatpush1.bf16.msra.mxu0 %v382
    %527 = vmatprep.subr.bf16.mxu0 %v387
    %528 = vmatpush1.bf16.msra.mxu0 %v386
    %529 = vmatprep.subr.bf16.mxu0 %v391
    %530 = vmatpush1.bf16.msra.mxu0 %v390
    %531 = vmatprep.subr.bf16.mxu0 %v395
    %532 = vmatpush1.bf16.msra.mxu0 %v394
    %533 = vmatprep.mubr.bf16.mxu0 %v139
    %534 = vmatmul.mubr.bf16.gmra.mrb[0].mxu0 %v138
    %v535 = vpop.f32.mrb[0].mxu0
    %v536 = vadd.f32 %v126, %v535
    %v537 = vpop.f32.mrb[0].mxu0
    %v538 = vadd.f32 %v130, %v537
    %v539 = vpop.f32.mrb[0].mxu0
    %v540 = vpop.f32.mrb[0].mxu0
    %541 = vdwg.mxu0
    %v542 = vxor.u32 %v495, 2147483648
    %v543 = vmul.f32 %v542, 1.442695
    %v544 = vpow.pop %v543
    %v545 = vadd.f32 %v544, 1.0
    %v546 = vrcp.pop %v545
    %v547 = vmul.f32 1.0, %v546
    %v548 = vxor.u32 %v497, 2147483648
    %v549 = vmul.f32 %v548, 1.442695
    %v550 = vpow.pop %v549
    %v551 = vadd.f32 %v550, 1.0
    %v552 = vrcp.pop %v551
    %v553 = vmul.f32 1.0, %v552
    %v554 = vtanh.pop %v536
    %v555 = vxor.u32 %v538, 2147483648
    %v556 = vmul.f32 %v555, 1.442695
    %v557 = vpow.pop %v556
    %v558 = vadd.f32 %v557, 1.0
    %v559 = vrcp.pop %v558
    %v560 = vmul.f32 1.0, %v559
    %v561 = vmul.f32 %v553, %v137
    %v562 = vmul.f32 %v547, %v554
    %v563 = vadd.f32 %v561, %v562
    %v564 = vtanh.pop %v563
    %v565 = vmul.f32 %v560, %v564
    %p566 = scmp.lt.s32.totalorder %s135, 8
    %s567 = scalar_select %p566, 1, 0
    %v568 = vstv %s567
    %vm569 = vcmp.eq.s32.totalorder %v568, 1
    %v570 = vsel %vm569, %v565, %v136
    %v571 = vsel %vm569, %v563, %v137
    %s572 = scalar_lea.vmem [#allocation4], 4
    %v573 = vld [vmem:[%s572] sm:$0xf]
    %v574 = vpack.c.bf16 %v570, %v570
    %575 = vmatprep.subr.bf16.mxu0 %v333
    %576 = vmatpush1.bf16.msra.mxu0 %v332
    %577 = vmatprep.subr.bf16.mxu0 %v337
    %578 = vmatpush1.bf16.msra.mxu0 %v336
    %579 = vmatprep.subr.bf16.mxu0 %v341
    %580 = vmatpush1.bf16.msra.mxu0 %v340
    %581 = vmatprep.subr.bf16.mxu0 %v345
    %582 = vmatpush1.bf16.msra.mxu0 %v344
    %583 = vmatprep.subr.bf16.mxu0 %v349
    %584 = vmatpush1.bf16.msra.mxu0 %v348
    %585 = vmatprep.subr.bf16.mxu0 %v353
    %586 = vmatpush1.bf16.msra.mxu0 %v352
    %587 = vmatprep.subr.bf16.mxu0 %v357
    %588 = vmatpush1.bf16.msra.mxu0 %v356
    %589 = vmatprep.subr.bf16.mxu0 %v361
    %590 = vmatpush1.bf16.msra.mxu0 %v360
    %591 = vmatprep.subr.bf16.mxu0 %v365
    %592 = vmatpush1.bf16.msra.mxu0 %v364
    %593 = vmatprep.subr.bf16.mxu0 %v369
    %594 = vmatpush1.bf16.msra.mxu0 %v368
    %595 = vmatprep.subr.bf16.mxu0 %v373
    %596 = vmatpush1.bf16.msra.mxu0 %v372
    %597 = vmatprep.subr.bf16.mxu0 %v377
    %598 = vmatpush1.bf16.msra.mxu0 %v376
    %599 = vmatprep.subr.bf16.mxu0 %v381
    %600 = vmatpush1.bf16.msra.mxu0 %v380
    %601 = vmatprep.subr.bf16.mxu0 %v385
    %602 = vmatpush1.bf16.msra.mxu0 %v384
    %603 = vmatprep.subr.bf16.mxu0 %v389
    %604 = vmatpush1.bf16.msra.mxu0 %v388
    %605 = vmatprep.subr.bf16.mxu0 %v393
    %606 = vmatpush1.bf16.msra.mxu0 %v392
    %607 = vmatprep.mubr.bf16.mxu0 %v574
    %608 = vmatmul.mubr.bf16.gmra.mrb[0].mxu0 %v573
    %v609 = vpop.f32.mrb[0].mxu0
    %v610 = vadd.f32 %v118, %v609
    %v611 = vpop.f32.mrb[0].mxu0
    %v612 = vadd.f32 %v122, %v611
    %v613 = vpop.f32.mrb[0].mxu0
    %v614 = vpop.f32.mrb[0].mxu0
    %615 = vdwg.mxu0
    %616 = vmatprep.subr.bf16.mxu0 %v335
    %617 = vmatpush1.bf16.msra.mxu0 %v334
    %618 = vmatprep.subr.bf16.mxu0 %v339
    %619 = vmatpush1.bf16.msra.mxu0 %v338
    %620 = vmatprep.subr.bf16.mxu0 %v343
    %621 = vmatpush1.bf16.msra.mxu0 %v342
    %622 = vmatprep.subr.bf16.mxu0 %v347
    %623 = vmatpush1.bf16.msra.mxu0 %v346
    %624 = vmatprep.subr.bf16.mxu0 %v351
    %625 = vmatpush1.bf16.msra.mxu0 %v350
    %626 = vmatprep.subr.bf16.mxu0 %v355
    %627 = vmatpush1.bf16.msra.mxu0 %v354
    %628 = vmatprep.subr.bf16.mxu0 %v359
    %629 = vmatpush1.bf16.msra.mxu0 %v358
    %630 = vmatprep.subr.bf16.mxu0 %v363
    %631 = vmatpush1.bf16.msra.mxu0 %v362
    %632 = vmatprep.subr.bf16.mxu0 %v367
    %633 = vmatpush1.bf16.msra.mxu0 %v366
    %634 = vmatprep.subr.bf16.mxu0 %v371
    %635 = vmatpush1.bf16.msra.mxu0 %v370
    %636 = vmatprep.subr.bf16.mxu0 %v375
    %637 = vmatpush1.bf16.msra.mxu0 %v374
    %638 = vmatprep.subr.bf16.mxu0 %v379
    %639 = vmatpush1.bf16.msra.mxu0 %v378
    %640 = vmatprep.subr.bf16.mxu0 %v383
    %641 = vmatpush1.bf16.msra.mxu0 %v382
    %642 = vmatprep.subr.bf16.mxu0 %v387
    %643 = vmatpush1.bf16.msra.mxu0 %v386
    %644 = vmatprep.subr.bf16.mxu0 %v391
    %645 = vmatpush1.bf16.msra.mxu0 %v390
    %646 = vmatprep.subr.bf16.mxu0 %v395
    %647 = vmatpush1.bf16.msra.mxu0 %v394
    %648 = vmatprep.mubr.bf16.mxu0 %v574
    %649 = vmatmul.mubr.bf16.gmra.mrb[0].mxu0 %v573
    %v650 = vpop.f32.mrb[0].mxu0
    %v651 = vadd.f32 %v126, %v650
    %v652 = vpop.f32.mrb[0].mxu0
    %v653 = vadd.f32 %v130, %v652
    %v654 = vpop.f32.mrb[0].mxu0
    %v655 = vpop.f32.mrb[0].mxu0
    %656 = vdwg.mxu0
    %v657 = vxor.u32 %v610, 2147483648
    %v658 = vmul.f32 %v657, 1.442695
    %v659 = vpow.pop %v658
    %v660 = vadd.f32 %v659, 1.0
    %v661 = vrcp.pop %v660
    %v662 = vmul.f32 1.0, %v661
    %v663 = vxor.u32 %v612, 2147483648
    %v664 = vmul.f32 %v663, 1.442695
    %v665 = vpow.pop %v664
    %v666 = vadd.f32 %v665, 1.0
    %v667 = vrcp.pop %v666
    %v668 = vmul.f32 1.0, %v667
    %v669 = vtanh.pop %v651
    %v670 = vxor.u32 %v653, 2147483648
    %v671 = vmul.f32 %v670, 1.442695
    %v672 = vpow.pop %v671
    %v673 = vadd.f32 %v672, 1.0
    %v674 = vrcp.pop %v673
    %v675 = vmul.f32 1.0, %v674
    %v676 = vmul.f32 %v668, %v571
    %v677 = vmul.f32 %v662, %v669
    %v678 = vadd.f32 %v676, %v677
    %v679 = vtanh.pop %v678
    %v680 = vmul.f32 %v675, %v679
    %s681 = sadd.s32 %s135, 1
    %p682 = scmp.lt.s32.totalorder %s681, 8
    %s683 = scalar_select %p682, 1, 0
    %v684 = vstv %s683
    %vm685 = vcmp.eq.s32.totalorder %v684, 1
    %v686 = vsel %vm685, %v680, %v570
    %v687 = vsel %vm685, %v678, %v571
    %s688 = scalar_lea.vmem [#allocation4], 8
    %v689 = vld [vmem:[%s688] sm:$0xf]
    %v690 = vpack.c.bf16 %v686, %v686
    %691 = vmatprep.subr.bf16.mxu0 %v333
    %692 = vmatpush1.bf16.msra.mxu0 %v332
    %693 = vmatprep.subr.bf16.mxu0 %v337
    %694 = vmatpush1.bf16.msra.mxu0 %v336
    %695 = vmatprep.subr.bf16.mxu0 %v341
    %696 = vmatpush1.bf16.msra.mxu0 %v340
    %697 = vmatprep.subr.bf16.mxu0 %v345
    %698 = vmatpush1.bf16.msra.mxu0 %v344
    %699 = vmatprep.subr.bf16.mxu0 %v349
    %700 = vmatpush1.bf16.msra.mxu0 %v348
    %701 = vmatprep.subr.bf16.mxu0 %v353
    %702 = vmatpush1.bf16.msra.mxu0 %v352
    %703 = vmatprep.subr.bf16.mxu0 %v357
    %704 = vmatpush1.bf16.msra.mxu0 %v356
    %705 = vmatprep.subr.bf16.mxu0 %v361
    %706 = vmatpush1.bf16.msra.mxu0 %v360
    %707 = vmatprep.subr.bf16.mxu0 %v365
    %708 = vmatpush1.bf16.msra.mxu0 %v364
    %709 = vmatprep.subr.bf16.mxu0 %v369
    %710 = vmatpush1.bf16.msra.mxu0 %v368
    %711 = vmatprep.subr.bf16.mxu0 %v373
    %712 = vmatpush1.bf16.msra.mxu0 %v372
    %713 = vmatprep.subr.bf16.mxu0 %v377
    %714 = vmatpush1.bf16.msra.mxu0 %v376
    %715 = vmatprep.subr.bf16.mxu0 %v381
    %716 = vmatpush1.bf16.msra.mxu0 %v380
    %717 = vmatprep.subr.bf16.mxu0 %v385
    %718 = vmatpush1.bf16.msra.mxu0 %v384
    %719 = vmatprep.subr.bf16.mxu0 %v389
    %720 = vmatpush1.bf16.msra.mxu0 %v388
    %721 = vmatprep.subr.bf16.mxu0 %v393
    %722 = vmatpush1.bf16.msra.mxu0 %v392
    %723 = vmatprep.mubr.bf16.mxu0 %v690
    %724 = vmatmul.mubr.bf16.gmra.mrb[0].mxu0 %v689
    %v725 = vpop.f32.mrb[0].mxu0
    %v726 = vadd.f32 %v118, %v725
    %v727 = vpop.f32.mrb[0].mxu0
    %v728 = vadd.f32 %v122, %v727
    %v729 = vpop.f32.mrb[0].mxu0
    %v730 = vpop.f32.mrb[0].mxu0
    %731 = vdwg.mxu0
    %732 = vmatprep.subr.bf16.mxu0 %v335
    %733 = vmatpush1.bf16.msra.mxu0 %v334
    %734 = vmatprep.subr.bf16.mxu0 %v339
    %735 = vmatpush1.bf16.msra.mxu0 %v338
    %736 = vmatprep.subr.bf16.mxu0 %v343
    %737 = vmatpush1.bf16.msra.mxu0 %v342
    %738 = vmatprep.subr.bf16.mxu0 %v347
    %739 = vmatpush1.bf16.msra.mxu0 %v346
    %740 = vmatprep.subr.bf16.mxu0 %v351
    %741 = vmatpush1.bf16.msra.mxu0 %v350
    %742 = vmatprep.subr.bf16.mxu0 %v355
    %743 = vmatpush1.bf16.msra.mxu0 %v354
    %744 = vmatprep.subr.bf16.mxu0 %v359
    %745 = vmatpush1.bf16.msra.mxu0 %v358
    %746 = vmatprep.subr.bf16.mxu0 %v363
    %747 = vmatpush1.bf16.msra.mxu0 %v362
    %748 = vmatprep.subr.bf16.mxu0 %v367
    %749 = vmatpush1.bf16.msra.mxu0 %v366
    %750 = vmatprep.subr.bf16.mxu0 %v371
    %751 = vmatpush1.bf16.msra.mxu0 %v370
    %752 = vmatprep.subr.bf16.mxu0 %v375
    %753 = vmatpush1.bf16.msra.mxu0 %v374
    %754 = vmatprep.subr.bf16.mxu0 %v379
    %755 = vmatpush1.bf16.msra.mxu0 %v378
    %756 = vmatprep.subr.bf16.mxu0 %v383
    %757 = vmatpush1.bf16.msra.mxu0 %v382
    %758 = vmatprep.subr.bf16.mxu0 %v387
    %759 = vmatpush1.bf16.msra.mxu0 %v386
    %760 = vmatprep.subr.bf16.mxu0 %v391
    %761 = vmatpush1.bf16.msra.mxu0 %v390
    %762 = vmatprep.subr.bf16.mxu0 %v395
    %763 = vmatpush1.bf16.msra.mxu0 %v394
    %764 = vmatprep.mubr.bf16.mxu0 %v690
    %765 = vmatmul.mubr.bf16.gmra.mrb[0].mxu0 %v689
    %v766 = vpop.f32.mrb[0].mxu0
    %v767 = vadd.f32 %v126, %v766
    %v768 = vpop.f32.mrb[0].mxu0
    %v769 = vadd.f32 %v130, %v768
    %v770 = vpop.f32.mrb[0].mxu0
    %v771 = vpop.f32.mrb[0].mxu0
    %772 = vdwg.mxu0
    %v773 = vxor.u32 %v726, 2147483648
    %v774 = vmul.f32 %v773, 1.442695
    %v775 = vpow.pop %v774
    %v776 = vadd.f32 %v775, 1.0
    %v777 = vrcp.pop %v776
    %v778 = vmul.f32 1.0, %v777
    %v779 = vxor.u32 %v728, 2147483648
    %v780 = vmul.f32 %v779, 1.442695
    %v781 = vpow.pop %v780
    %v782 = vadd.f32 %v781, 1.0
    %v783 = vrcp.pop %v782
    %v784 = vmul.f32 1.0, %v783
    %v785 = vtanh.pop %v767
    %v786 = vxor.u32 %v769, 2147483648
    %v787 = vmul.f32 %v786, 1.442695
    %v788 = vpow.pop %v787
    %v789 = vadd.f32 %v788, 1.0
    %v790 = vrcp.pop %v789
    %v791 = vmul.f32 1.0, %v790
    %v792 = vmul.f32 %v784, %v687
    %v793 = vmul.f32 %v778, %v785
    %v794 = vadd.f32 %v792, %v793
    %v795 = vtanh.pop %v794
    %v796 = vmul.f32 %v791, %v795
    %s797 = sadd.s32 %s135, 2
    %p798 = scmp.lt.s32.totalorder %s797, 8
    %s799 = scalar_select %p798, 1, 0
    %v800 = vstv %s799
    %vm801 = vcmp.eq.s32.totalorder %v800, 1
    %v802 = vsel %vm801, %v796, %v686
    %v803 = vsel %vm801, %v794, %v687
    %s804 = scalar_lea.vmem [#allocation4], 12
    %v805 = vld [vmem:[%s804] sm:$0xf]
    %v806 = vpack.c.bf16 %v802, %v802
    %807 = vmatprep.subr.bf16.mxu0 %v333
    %808 = vmatpush1.bf16.msra.mxu0 %v332
    %809 = vmatprep.subr.bf16.mxu0 %v337
    %810 = vmatpush1.bf16.msra.mxu0 %v336
    %811 = vmatprep.subr.bf16.mxu0 %v341
    %812 = vmatpush1.bf16.msra.mxu0 %v340
    %813 = vmatprep.subr.bf16.mxu0 %v345
    %814 = vmatpush1.bf16.msra.mxu0 %v344
    %815 = vmatprep.subr.bf16.mxu0 %v349
    %816 = vmatpush1.bf16.msra.mxu0 %v348
    %817 = vmatprep.subr.bf16.mxu0 %v353
    %818 = vmatpush1.bf16.msra.mxu0 %v352
    %819 = vmatprep.subr.bf16.mxu0 %v357
    %820 = vmatpush1.bf16.msra.mxu0 %v356
    %821 = vmatprep.subr.bf16.mxu0 %v361
    %822 = vmatpush1.bf16.msra.mxu0 %v360
    %823 = vmatprep.subr.bf16.mxu0 %v365
    %824 = vmatpush1.bf16.msra.mxu0 %v364
    %825 = vmatprep.subr.bf16.mxu0 %v369
    %826 = vmatpush1.bf16.msra.mxu0 %v368
    %827 = vmatprep.subr.bf16.mxu0 %v373
    %828 = vmatpush1.bf16.msra.mxu0 %v372
    %829 = vmatprep.subr.bf16.mxu0 %v377
    %830 = vmatpush1.bf16.msra.mxu0 %v376
    %831 = vmatprep.subr.bf16.mxu0 %v381
    %832 = vmatpush1.bf16.msra.mxu0 %v380
    %833 = vmatprep.subr.bf16.mxu0 %v385
    %834 = vmatpush1.bf16.msra.mxu0 %v384
    %835 = vmatprep.subr.bf16.mxu0 %v389
    %836 = vmatpush1.bf16.msra.mxu0 %v388
    %837 = vmatprep.subr.bf16.mxu0 %v393
    %838 = vmatpush1.bf16.msra.mxu0 %v392
    %839 = vmatprep.mubr.bf16.mxu0 %v806
    %840 = vmatmul.mubr.bf16.gmra.mrb[0].mxu0 %v805
    %v841 = vpop.f32.mrb[0].mxu0
    %v842 = vadd.f32 %v118, %v841
    %v843 = vpop.f32.mrb[0].mxu0
    %v844 = vadd.f32 %v122, %v843
    %v845 = vpop.f32.mrb[0].mxu0
    %v846 = vpop.f32.mrb[0].mxu0
    %847 = vdwg.mxu0
    %848 = vmatprep.subr.bf16.mxu0 %v335
    %849 = vmatpush1.bf16.msra.mxu0 %v334
    %850 = vmatprep.subr.bf16.mxu0 %v339
    %851 = vmatpush1.bf16.msra.mxu0 %v338
    %852 = vmatprep.subr.bf16.mxu0 %v343
    %853 = vmatpush1.bf16.msra.mxu0 %v342
    %854 = vmatprep.subr.bf16.mxu0 %v347
    %855 = vmatpush1.bf16.msra.mxu0 %v346
    %856 = vmatprep.subr.bf16.mxu0 %v351
    %857 = vmatpush1.bf16.msra.mxu0 %v350
    %858 = vmatprep.subr.bf16.mxu0 %v355
    %859 = vmatpush1.bf16.msra.mxu0 %v354
    %860 = vmatprep.subr.bf16.mxu0 %v359
    %861 = vmatpush1.bf16.msra.mxu0 %v358
    %862 = vmatprep.subr.bf16.mxu0 %v363
    %863 = vmatpush1.bf16.msra.mxu0 %v362
    %864 = vmatprep.subr.bf16.mxu0 %v367
    %865 = vmatpush1.bf16.msra.mxu0 %v366
    %866 = vmatprep.subr.bf16.mxu0 %v371
    %867 = vmatpush1.bf16.msra.mxu0 %v370
    %868 = vmatprep.subr.bf16.mxu0 %v375
    %869 = vmatpush1.bf16.msra.mxu0 %v374
    %870 = vmatprep.subr.bf16.mxu0 %v379
    %871 = vmatpush1.bf16.msra.mxu0 %v378
    %872 = vmatprep.subr.bf16.mxu0 %v383
    %873 = vmatpush1.bf16.msra.mxu0 %v382
    %874 = vmatprep.subr.bf16.mxu0 %v387
    %875 = vmatpush1.bf16.msra.mxu0 %v386
    %876 = vmatprep.subr.bf16.mxu0 %v391
    %877 = vmatpush1.bf16.msra.mxu0 %v390
    %878 = vmatprep.subr.bf16.mxu0 %v395
    %879 = vmatpush1.bf16.msra.mxu0 %v394
    %880 = vmatprep.mubr.bf16.mxu0 %v806
    %881 = vmatmul.mubr.bf16.gmra.mrb[0].mxu0 %v805
    %v882 = vpop.f32.mrb[0].mxu0
    %v883 = vadd.f32 %v126, %v882
    %v884 = vpop.f32.mrb[0].mxu0
    %v885 = vadd.f32 %v130, %v884
    %v886 = vpop.f32.mrb[0].mxu0
    %v887 = vpop.f32.mrb[0].mxu0
    %888 = vdwg.mxu0
    %v889 = vxor.u32 %v842, 2147483648
    %v890 = vmul.f32 %v889, 1.442695
    %v891 = vpow.pop %v890
    %v892 = vadd.f32 %v891, 1.0
    %v893 = vrcp.pop %v892
    %v894 = vmul.f32 1.0, %v893
    %v895 = vxor.u32 %v844, 2147483648
    %v896 = vmul.f32 %v895, 1.442695
    %v897 = vpow.pop %v896
    %v898 = vadd.f32 %v897, 1.0
    %v899 = vrcp.pop %v898
    %v900 = vmul.f32 1.0, %v899
    %v901 = vtanh.pop %v883
    %v902 = vxor.u32 %v885, 2147483648
    %v903 = vmul.f32 %v902, 1.442695
    %v904 = vpow.pop %v903
    %v905 = vadd.f32 %v904, 1.0
    %v906 = vrcp.pop %v905
    %v907 = vmul.f32 1.0, %v906
    %v908 = vmul.f32 %v900, %v803
    %v909 = vmul.f32 %v894, %v901
    %v910 = vadd.f32 %v908, %v909
    %v911 = vtanh.pop %v910
    %v912 = vmul.f32 %v907, %v911
    %s913 = sadd.s32 %s135, 3
    %p914 = scmp.lt.s32.totalorder %s913, 8
    %s915 = scalar_select %p914, 1, 0
    %v916 = vstv %s915
    %vm917 = vcmp.eq.s32.totalorder %v916, 1
    %v918 = vsel %vm917, %v912, %v802
    %v919 = vsel %vm917, %v910, %v803
    %s920 = scalar_lea.vmem [#allocation4], 16
    %v921 = vld [vmem:[%s920] sm:$0xf]
    %v922 = vpack.c.bf16 %v918, %v918
    %923 = vmatprep.subr.bf16.mxu0 %v333
    %924 = vmatpush1.bf16.msra.mxu0 %v332
    %925 = vmatprep.subr.bf16.mxu0 %v337
    %926 = vmatpush1.bf16.msra.mxu0 %v336
    %927 = vmatprep.subr.bf16.mxu0 %v341
    %928 = vmatpush1.bf16.msra.mxu0 %v340
    %929 = vmatprep.subr.bf16.mxu0 %v345
    %930 = vmatpush1.bf16.msra.mxu0 %v344
    %931 = vmatprep.subr.bf16.mxu0 %v349
    %932 = vmatpush1.bf16.msra.mxu0 %v348
    %933 = vmatprep.subr.bf16.mxu0 %v353
    %934 = vmatpush1.bf16.msra.mxu0 %v352
    %935 = vmatprep.subr.bf16.mxu0 %v357
    %936 = vmatpush1.bf16.msra.mxu0 %v356
    %937 = vmatprep.subr.bf16.mxu0 %v361
    %938 = vmatpush1.bf16.msra.mxu0 %v360
    %939 = vmatprep.subr.bf16.mxu0 %v365
    %940 = vmatpush1.bf16.msra.mxu0 %v364
    %941 = vmatprep.subr.bf16.mxu0 %v369
    %942 = vmatpush1.bf16.msra.mxu0 %v368
    %943 = vmatprep.subr.bf16.mxu0 %v373
    %944 = vmatpush1.bf16.msra.mxu0 %v372
    %945 = vmatprep.subr.bf16.mxu0 %v377
    %946 = vmatpush1.bf16.msra.mxu0 %v376
    %947 = vmatprep.subr.bf16.mxu0 %v381
    %948 = vmatpush1.bf16.msra.mxu0 %v380
    %949 = vmatprep.subr.bf16.mxu0 %v385
    %950 = vmatpush1.bf16.msra.mxu0 %v384
    %951 = vmatprep.subr.bf16.mxu0 %v389
    %952 = vmatpush1.bf16.msra.mxu0 %v388
    %953 = vmatprep.subr.bf16.mxu0 %v393
    %954 = vmatpush1.bf16.msra.mxu0 %v392
    %955 = vmatprep.mubr.bf16.mxu0 %v922
    %956 = vmatmul.mubr.bf16.gmra.mrb[0].mxu0 %v921
    %v957 = vpop.f32.mrb[0].mxu0
    %v958 = vadd.f32 %v118, %v957
    %v959 = vpop.f32.mrb[0].mxu0
    %v960 = vadd.f32 %v122, %v959
    %v961 = vpop.f32.mrb[0].mxu0
    %v962 = vpop.f32.mrb[0].mxu0
    %963 = vdwg.mxu0
    %964 = vmatprep.subr.bf16.mxu0 %v335
    %965 = vmatpush1.bf16.msra.mxu0 %v334
    %966 = vmatprep.subr.bf16.mxu0 %v339
    %967 = vmatpush1.bf16.msra.mxu0 %v338
    %968 = vmatprep.subr.bf16.mxu0 %v343
    %969 = vmatpush1.bf16.msra.mxu0 %v342
    %970 = vmatprep.subr.bf16.mxu0 %v347
    %971 = vmatpush1.bf16.msra.mxu0 %v346
    %972 = vmatprep.subr.bf16.mxu0 %v351
    %973 = vmatpush1.bf16.msra.mxu0 %v350
    %974 = vmatprep.subr.bf16.mxu0 %v355
    %975 = vmatpush1.bf16.msra.mxu0 %v354
    %976 = vmatprep.subr.bf16.mxu0 %v359
    %977 = vmatpush1.bf16.msra.mxu0 %v358
    %978 = vmatprep.subr.bf16.mxu0 %v363
    %979 = vmatpush1.bf16.msra.mxu0 %v362
    %980 = vmatprep.subr.bf16.mxu0 %v367
    %981 = vmatpush1.bf16.msra.mxu0 %v366
    %982 = vmatprep.subr.bf16.mxu0 %v371
    %983 = vmatpush1.bf16.msra.mxu0 %v370
    %984 = vmatprep.subr.bf16.mxu0 %v375
    %985 = vmatpush1.bf16.msra.mxu0 %v374
    %986 = vmatprep.subr.bf16.mxu0 %v379
    %987 = vmatpush1.bf16.msra.mxu0 %v378
    %988 = vmatprep.subr.bf16.mxu0 %v383
    %989 = vmatpush1.bf16.msra.mxu0 %v382
    %990 = vmatprep.subr.bf16.mxu0 %v387
    %991 = vmatpush1.bf16.msra.mxu0 %v386
    %992 = vmatprep.subr.bf16.mxu0 %v391
    %993 = vmatpush1.bf16.msra.mxu0 %v390
    %994 = vmatprep.subr.bf16.mxu0 %v395
    %995 = vmatpush1.bf16.msra.mxu0 %v394
    %996 = vmatprep.mubr.bf16.mxu0 %v922
    %997 = vmatmul.mubr.bf16.gmra.mrb[0].mxu0 %v921
    %v998 = vpop.f32.mrb[0].mxu0
    %v999 = vadd.f32 %v126, %v998
    %v1000 = vpop.f32.mrb[0].mxu0
    %v1001 = vadd.f32 %v130, %v1000
    %v1002 = vpop.f32.mrb[0].mxu0
    %v1003 = vpop.f32.mrb[0].mxu0
    %1004 = vdwg.mxu0
    %v1005 = vxor.u32 %v958, 2147483648
    %v1006 = vmul.f32 %v1005, 1.442695
    %v1007 = vpow.pop %v1006
    %v1008 = vadd.f32 %v1007, 1.0
    %v1009 = vrcp.pop %v1008
    %v1010 = vmul.f32 1.0, %v1009
    %v1011 = vxor.u32 %v960, 2147483648
    %v1012 = vmul.f32 %v1011, 1.442695
    %v1013 = vpow.pop %v1012
    %v1014 = vadd.f32 %v1013, 1.0
    %v1015 = vrcp.pop %v1014
    %v1016 = vmul.f32 1.0, %v1015
    %v1017 = vtanh.pop %v999
    %v1018 = vxor.u32 %v1001, 2147483648
    %v1019 = vmul.f32 %v1018, 1.442695
    %v1020 = vpow.pop %v1019
    %v1021 = vadd.f32 %v1020, 1.0
    %v1022 = vrcp.pop %v1021
    %v1023 = vmul.f32 1.0, %v1022
    %v1024 = vmul.f32 %v1016, %v919
    %v1025 = vmul.f32 %v1010, %v1017
    %v1026 = vadd.f32 %v1024, %v1025
    %v1027 = vtanh.pop %v1026
    %v1028 = vmul.f32 %v1023, %v1027
    %s1029 = sadd.s32 %s135, 4
    %p1030 = scmp.lt.s32.totalorder %s1029, 8
    %s1031 = scalar_select %p1030, 1, 0
    %v1032 = vstv %s1031
    %vm1033 = vcmp.eq.s32.totalorder %v1032, 1
    %v1034 = vsel %vm1033, %v1028, %v918
    %v1035 = vsel %vm1033, %v1026, %v919
    %s1036 = scalar_lea.vmem [#allocation4], 20
    %v1037 = vld [vmem:[%s1036] sm:$0xf]
    %v1038 = vpack.c.bf16 %v1034, %v1034
    %1039 = vmatprep.subr.bf16.mxu0 %v333
    %1040 = vmatpush1.bf16.msra.mxu0 %v332
    %1041 = vmatprep.subr.bf16.mxu0 %v337
    %1042 = vmatpush1.bf16.msra.mxu0 %v336
    %1043 = vmatprep.subr.bf16.mxu0 %v341
    %1044 = vmatpush1.bf16.msra.mxu0 %v340
    %1045 = vmatprep.subr.bf16.mxu0 %v345
    %1046 = vmatpush1.bf16.msra.mxu0 %v344
    %1047 = vmatprep.subr.bf16.mxu0 %v349
    %1048 = vmatpush1.bf16.msra.mxu0 %v348
    %1049 = vmatprep.subr.bf16.mxu0 %v353
    %1050 = vmatpush1.bf16.msra.mxu0 %v352
    %1051 = vmatprep.subr.bf16.mxu0 %v357
    %1052 = vmatpush1.bf16.msra.mxu0 %v356
    %1053 = vmatprep.subr.bf16.mxu0 %v361
    %1054 = vmatpush1.bf16.msra.mxu0 %v360
    %1055 = vmatprep.subr.bf16.mxu0 %v365
    %1056 = vmatpush1.bf16.msra.mxu0 %v364
    %1057 = vmatprep.subr.bf16.mxu0 %v369
    %1058 = vmatpush1.bf16.msra.mxu0 %v368
    %1059 = vmatprep.subr.bf16.mxu0 %v373
    %1060 = vmatpush1.bf16.msra.mxu0 %v372
    %1061 = vmatprep.subr.bf16.mxu0 %v377
    %1062 = vmatpush1.bf16.msra.mxu0 %v376
    %1063 = vmatprep.subr.bf16.mxu0 %v381
    %1064 = vmatpush1.bf16.msra.mxu0 %v380
    %1065 = vmatprep.subr.bf16.mxu0 %v385
    %1066 = vmatpush1.bf16.msra.mxu0 %v384
    %1067 = vmatprep.subr.bf16.mxu0 %v389
    %1068 = vmatpush1.bf16.msra.mxu0 %v388
    %1069 = vmatprep.subr.bf16.mxu0 %v393
    %1070 = vmatpush1.bf16.msra.mxu0 %v392
    %1071 = vmatprep.mubr.bf16.mxu0 %v1038
    %1072 = vmatmul.mubr.bf16.gmra.mrb[0].mxu0 %v1037
    %v1073 = vpop.f32.mrb[0].mxu0
    %v1074 = vadd.f32 %v118, %v1073
    %v1075 = vpop.f32.mrb[0].mxu0
    %v1076 = vadd.f32 %v122, %v1075
    %v1077 = vpop.f32.mrb[0].mxu0
    %v1078 = vpop.f32.mrb[0].mxu0
    %1079 = vdwg.mxu0
    %1080 = vmatprep.subr.bf16.mxu0 %v335
    %1081 = vmatpush1.bf16.msra.mxu0 %v334
    %1082 = vmatprep.subr.bf16.mxu0 %v339
    %1083 = vmatpush1.bf16.msra.mxu0 %v338
    %1084 = vmatprep.subr.bf16.mxu0 %v343
    %1085 = vmatpush1.bf16.msra.mxu0 %v342
    %1086 = vmatprep.subr.bf16.mxu0 %v347
    %1087 = vmatpush1.bf16.msra.mxu0 %v346
    %1088 = vmatprep.subr.bf16.mxu0 %v351
    %1089 = vmatpush1.bf16.msra.mxu0 %v350
    %1090 = vmatprep.subr.bf16.mxu0 %v355
    %1091 = vmatpush1.bf16.msra.mxu0 %v354
    %1092 = vmatprep.subr.bf16.mxu0 %v359
    %1093 = vmatpush1.bf16.msra.mxu0 %v358
    %1094 = vmatprep.subr.bf16.mxu0 %v363
    %1095 = vmatpush1.bf16.msra.mxu0 %v362
    %1096 = vmatprep.subr.bf16.mxu0 %v367
    %1097 = vmatpush1.bf16.msra.mxu0 %v366
    %1098 = vmatprep.subr.bf16.mxu0 %v371
    %1099 = vmatpush1.bf16.msra.mxu0 %v370
    %1100 = vmatprep.subr.bf16.mxu0 %v375
    %1101 = vmatpush1.bf16.msra.mxu0 %v374
    %1102 = vmatprep.subr.bf16.mxu0 %v379
    %1103 = vmatpush1.bf16.msra.mxu0 %v378
    %1104 = vmatprep.subr.bf16.mxu0 %v383
    %1105 = vmatpush1.bf16.msra.mxu0 %v382
    %1106 = vmatprep.subr.bf16.mxu0 %v387
    %1107 = vmatpush1.bf16.msra.mxu0 %v386
    %1108 = vmatprep.subr.bf16.mxu0 %v391
    %1109 = vmatpush1.bf16.msra.mxu0 %v390
    %1110 = vmatprep.subr.bf16.mxu0 %v395
    %1111 = vmatpush1.bf16.msra.mxu0 %v394
    %1112 = vmatprep.mubr.bf16.mxu0 %v1038
    %1113 = vmatmul.mubr.bf16.gmra.mrb[0].mxu0 %v1037
    %v1114 = vpop.f32.mrb[0].mxu0
    %v1115 = vadd.f32 %v126, %v1114
    %v1116 = vpop.f32.mrb[0].mxu0
    %v1117 = vadd.f32 %v130, %v1116
    %v1118 = vpop.f32.mrb[0].mxu0
    %v1119 = vpop.f32.mrb[0].mxu0
    %1120 = vdwg.mxu0
    %v1121 = vxor.u32 %v1074, 2147483648
    %v1122 = vmul.f32 %v1121, 1.442695
    %v1123 = vpow.pop %v1122
    %v1124 = vadd.f32 %v1123, 1.0
    %v1125 = vrcp.pop %v1124
    %v1126 = vmul.f32 1.0, %v1125
    %v1127 = vxor.u32 %v1076, 2147483648
    %v1128 = vmul.f32 %v1127, 1.442695
    %v1129 = vpow.pop %v1128
    %v1130 = vadd.f32 %v1129, 1.0
    %v1131 = vrcp.pop %v1130
    %v1132 = vmul.f32 1.0, %v1131
    %v1133 = vtanh.pop %v1115
    %v1134 = vxor.u32 %v1117, 2147483648
    %v1135 = vmul.f32 %v1134, 1.442695
    %v1136 = vpow.pop %v1135
    %v1137 = vadd.f32 %v1136, 1.0
    %v1138 = vrcp.pop %v1137
    %v1139 = vmul.f32 1.0, %v1138
    %v1140 = vmul.f32 %v1132, %v1035
    %v1141 = vmul.f32 %v1126, %v1133
    %v1142 = vadd.f32 %v1140, %v1141
    %v1143 = vtanh.pop %v1142
    %v1144 = vmul.f32 %v1139, %v1143
    %s1145 = sadd.s32 %s135, 5
    %p1146 = scmp.lt.s32.totalorder %s1145, 8
    %s1147 = scalar_select %p1146, 1, 0
    %v1148 = vstv %s1147
    %vm1149 = vcmp.eq.s32.totalorder %v1148, 1
    %v1150 = vsel %vm1149, %v1144, %v1034
    %v1151 = vsel %vm1149, %v1142, %v1035
    %s1152 = scalar_lea.vmem [#allocation4], 24
    %v1153 = vld [vmem:[%s1152] sm:$0xf]
    %v1154 = vpack.c.bf16 %v1150, %v1150
    %1155 = vmatprep.subr.bf16.mxu0 %v333
    %1156 = vmatpush1.bf16.msra.mxu0 %v332
    %1157 = vmatprep.subr.bf16.mxu0 %v337
    %1158 = vmatpush1.bf16.msra.mxu0 %v336
    %1159 = vmatprep.subr.bf16.mxu0 %v341
    %1160 = vmatpush1.bf16.msra.mxu0 %v340
    %1161 = vmatprep.subr.bf16.mxu0 %v345
    %1162 = vmatpush1.bf16.msra.mxu0 %v344
    %1163 = vmatprep.subr.bf16.mxu0 %v349
    %1164 = vmatpush1.bf16.msra.mxu0 %v348
    %1165 = vmatprep.subr.bf16.mxu0 %v353
    %1166 = vmatpush1.bf16.msra.mxu0 %v352
    %1167 = vmatprep.subr.bf16.mxu0 %v357
    %1168 = vmatpush1.bf16.msra.mxu0 %v356
    %1169 = vmatprep.subr.bf16.mxu0 %v361
    %1170 = vmatpush1.bf16.msra.mxu0 %v360
    %1171 = vmatprep.subr.bf16.mxu0 %v365
    %1172 = vmatpush1.bf16.msra.mxu0 %v364
    %1173 = vmatprep.subr.bf16.mxu0 %v369
    %1174 = vmatpush1.bf16.msra.mxu0 %v368
    %1175 = vmatprep.subr.bf16.mxu0 %v373
    %1176 = vmatpush1.bf16.msra.mxu0 %v372
    %1177 = vmatprep.subr.bf16.mxu0 %v377
    %1178 = vmatpush1.bf16.msra.mxu0 %v376
    %1179 = vmatprep.subr.bf16.mxu0 %v381
    %1180 = vmatpush1.bf16.msra.mxu0 %v380
    %1181 = vmatprep.subr.bf16.mxu0 %v385
    %1182 = vmatpush1.bf16.msra.mxu0 %v384
    %1183 = vmatprep.subr.bf16.mxu0 %v389
    %1184 = vmatpush1.bf16.msra.mxu0 %v388
    %1185 = vmatprep.subr.bf16.mxu0 %v393
    %1186 = vmatpush1.bf16.msra.mxu0 %v392
    %1187 = vmatprep.mubr.bf16.mxu0 %v1154
    %1188 = vmatmul.mubr.bf16.gmra.mrb[0].mxu0 %v1153
    %v1189 = vpop.f32.mrb[0].mxu0
    %v1190 = vadd.f32 %v118, %v1189
    %v1191 = vpop.f32.mrb[0].mxu0
    %v1192 = vadd.f32 %v122, %v1191
    %v1193 = vpop.f32.mrb[0].mxu0
    %v1194 = vpop.f32.mrb[0].mxu0
    %1195 = vdwg.mxu0
    %1196 = vmatprep.subr.bf16.mxu0 %v335
    %1197 = vmatpush1.bf16.msra.mxu0 %v334
    %1198 = vmatprep.subr.bf16.mxu0 %v339
    %1199 = vmatpush1.bf16.msra.mxu0 %v338
    %1200 = vmatprep.subr.bf16.mxu0 %v343
    %1201 = vmatpush1.bf16.msra.mxu0 %v342
    %1202 = vmatprep.subr.bf16.mxu0 %v347
    %1203 = vmatpush1.bf16.msra.mxu0 %v346
    %1204 = vmatprep.subr.bf16.mxu0 %v351
    %1205 = vmatpush1.bf16.msra.mxu0 %v350
    %1206 = vmatprep.subr.bf16.mxu0 %v355
    %1207 = vmatpush1.bf16.msra.mxu0 %v354
    %1208 = vmatprep.subr.bf16.mxu0 %v359
    %1209 = vmatpush1.bf16.msra.mxu0 %v358
    %1210 = vmatprep.subr.bf16.mxu0 %v363
    %1211 = vmatpush1.bf16.msra.mxu0 %v362
    %1212 = vmatprep.subr.bf16.mxu0 %v367
    %1213 = vmatpush1.bf16.msra.mxu0 %v366
    %1214 = vmatprep.subr.bf16.mxu0 %v371
    %1215 = vmatpush1.bf16.msra.mxu0 %v370
    %1216 = vmatprep.subr.bf16.mxu0 %v375
    %1217 = vmatpush1.bf16.msra.mxu0 %v374
    %1218 = vmatprep.subr.bf16.mxu0 %v379
    %1219 = vmatpush1.bf16.msra.mxu0 %v378
    %1220 = vmatprep.subr.bf16.mxu0 %v383
    %1221 = vmatpush1.bf16.msra.mxu0 %v382
    %1222 = vmatprep.subr.bf16.mxu0 %v387
    %1223 = vmatpush1.bf16.msra.mxu0 %v386
    %1224 = vmatprep.subr.bf16.mxu0 %v391
    %1225 = vmatpush1.bf16.msra.mxu0 %v390
    %1226 = vmatprep.subr.bf16.mxu0 %v395
    %1227 = vmatpush1.bf16.msra.mxu0 %v394
    %1228 = vmatprep.mubr.bf16.mxu0 %v1154
    %1229 = vmatmul.mubr.bf16.gmra.mrb[0].mxu0 %v1153
    %v1230 = vpop.f32.mrb[0].mxu0
    %v1231 = vadd.f32 %v126, %v1230
    %v1232 = vpop.f32.mrb[0].mxu0
    %v1233 = vadd.f32 %v130, %v1232
    %v1234 = vpop.f32.mrb[0].mxu0
    %v1235 = vpop.f32.mrb[0].mxu0
    %1236 = vdwg.mxu0
    %v1237 = vxor.u32 %v1190, 2147483648
    %v1238 = vmul.f32 %v1237, 1.442695
    %v1239 = vpow.pop %v1238
    %v1240 = vadd.f32 %v1239, 1.0
    %v1241 = vrcp.pop %v1240
    %v1242 = vmul.f32 1.0, %v1241
    %v1243 = vxor.u32 %v1192, 2147483648
    %v1244 = vmul.f32 %v1243, 1.442695
    %v1245 = vpow.pop %v1244
    %v1246 = vadd.f32 %v1245, 1.0
    %v1247 = vrcp.pop %v1246
    %v1248 = vmul.f32 1.0, %v1247
    %v1249 = vtanh.pop %v1231
    %v1250 = vxor.u32 %v1233, 2147483648
    %v1251 = vmul.f32 %v1250, 1.442695
    %v1252 = vpow.pop %v1251
    %v1253 = vadd.f32 %v1252, 1.0
    %v1254 = vrcp.pop %v1253
    %v1255 = vmul.f32 1.0, %v1254
    %v1256 = vmul.f32 %v1248, %v1151
    %v1257 = vmul.f32 %v1242, %v1249
    %v1258 = vadd.f32 %v1256, %v1257
    %v1259 = vtanh.pop %v1258
    %v1260 = vmul.f32 %v1255, %v1259
    %s1261 = sadd.s32 %s135, 6
    %p1262 = scmp.lt.s32.totalorder %s1261, 8
    %s1263 = scalar_select %p1262, 1, 0
    %v1264 = vstv %s1263
    %vm1265 = vcmp.eq.s32.totalorder %v1264, 1
    %v1266 = vsel %vm1265, %v1260, %v1150
    %v1267 = vsel %vm1265, %v1258, %v1151
    %s1268 = scalar_lea.vmem [#allocation4], 28
    %v1269 = vld [vmem:[%s1268] sm:$0xf]
    %v1270 = vpack.c.bf16 %v1266, %v1266
    %1271 = vmatprep.subr.bf16.mxu0 %v333
    %1272 = vmatpush1.bf16.msra.mxu0 %v332
    %1273 = vmatprep.subr.bf16.mxu0 %v337
    %1274 = vmatpush1.bf16.msra.mxu0 %v336
    %1275 = vmatprep.subr.bf16.mxu0 %v341
    %1276 = vmatpush1.bf16.msra.mxu0 %v340
    %1277 = vmatprep.subr.bf16.mxu0 %v345
    %1278 = vmatpush1.bf16.msra.mxu0 %v344
    %1279 = vmatprep.subr.bf16.mxu0 %v349
    %1280 = vmatpush1.bf16.msra.mxu0 %v348
    %1281 = vmatprep.subr.bf16.mxu0 %v353
    %1282 = vmatpush1.bf16.msra.mxu0 %v352
    %1283 = vmatprep.subr.bf16.mxu0 %v357
    %1284 = vmatpush1.bf16.msra.mxu0 %v356
    %1285 = vmatprep.subr.bf16.mxu0 %v361
    %1286 = vmatpush1.bf16.msra.mxu0 %v360
    %1287 = vmatprep.subr.bf16.mxu0 %v365
    %1288 = vmatpush1.bf16.msra.mxu0 %v364
    %1289 = vmatprep.subr.bf16.mxu0 %v369
    %1290 = vmatpush1.bf16.msra.mxu0 %v368
    %1291 = vmatprep.subr.bf16.mxu0 %v373
    %1292 = vmatpush1.bf16.msra.mxu0 %v372
    %1293 = vmatprep.subr.bf16.mxu0 %v377
    %1294 = vmatpush1.bf16.msra.mxu0 %v376
    %1295 = vmatprep.subr.bf16.mxu0 %v381
    %1296 = vmatpush1.bf16.msra.mxu0 %v380
    %1297 = vmatprep.subr.bf16.mxu0 %v385
    %1298 = vmatpush1.bf16.msra.mxu0 %v384
    %1299 = vmatprep.subr.bf16.mxu0 %v389
    %1300 = vmatpush1.bf16.msra.mxu0 %v388
    %1301 = vmatprep.subr.bf16.mxu0 %v393
    %1302 = vmatpush1.bf16.msra.mxu0 %v392
    %1303 = vmatprep.mubr.bf16.mxu0 %v1270
    %1304 = vmatmul.mubr.bf16.gmra.mrb[0].mxu0 %v1269
    %v1305 = vpop.f32.mrb[0].mxu0
    %v1306 = vadd.f32 %v118, %v1305
    %v1307 = vpop.f32.mrb[0].mxu0
    %v1308 = vadd.f32 %v122, %v1307
    %v1309 = vpop.f32.mrb[0].mxu0
    %v1310 = vpop.f32.mrb[0].mxu0
    %1311 = vdwg.mxu0
    %1312 = vmatprep.subr.bf16.mxu0 %v335
    %1313 = vmatpush1.bf16.msra.mxu0 %v334
    %1314 = vmatprep.subr.bf16.mxu0 %v339
    %1315 = vmatpush1.bf16.msra.mxu0 %v338
    %1316 = vmatprep.subr.bf16.mxu0 %v343
    %1317 = vmatpush1.bf16.msra.mxu0 %v342
    %1318 = vmatprep.subr.bf16.mxu0 %v347
    %1319 = vmatpush1.bf16.msra.mxu0 %v346
    %1320 = vmatprep.subr.bf16.mxu0 %v351
    %1321 = vmatpush1.bf16.msra.mxu0 %v350
    %1322 = vmatprep.subr.bf16.mxu0 %v355
    %1323 = vmatpush1.bf16.msra.mxu0 %v354
    %1324 = vmatprep.subr.bf16.mxu0 %v359
    %1325 = vmatpush1.bf16.msra.mxu0 %v358
    %1326 = vmatprep.subr.bf16.mxu0 %v363
    %1327 = vmatpush1.bf16.msra.mxu0 %v362
    %1328 = vmatprep.subr.bf16.mxu0 %v367
    %1329 = vmatpush1.bf16.msra.mxu0 %v366
    %1330 = vmatprep.subr.bf16.mxu0 %v371
    %1331 = vmatpush1.bf16.msra.mxu0 %v370
    %1332 = vmatprep.subr.bf16.mxu0 %v375
    %1333 = vmatpush1.bf16.msra.mxu0 %v374
    %1334 = vmatprep.subr.bf16.mxu0 %v379
    %1335 = vmatpush1.bf16.msra.mxu0 %v378
    %1336 = vmatprep.subr.bf16.mxu0 %v383
    %1337 = vmatpush1.bf16.msra.mxu0 %v382
    %1338 = vmatprep.subr.bf16.mxu0 %v387
    %1339 = vmatpush1.bf16.msra.mxu0 %v386
    %1340 = vmatprep.subr.bf16.mxu0 %v391
    %1341 = vmatpush1.bf16.msra.mxu0 %v390
    %1342 = vmatprep.subr.bf16.mxu0 %v395
    %1343 = vmatpush1.bf16.msra.mxu0 %v394
    %1344 = vmatprep.mubr.bf16.mxu0 %v1270
    %1345 = vmatmul.mubr.bf16.gmra.mrb[0].mxu0 %v1269
    %v1346 = vpop.f32.mrb[0].mxu0
    %v1347 = vadd.f32 %v126, %v1346
    %v1348 = vpop.f32.mrb[0].mxu0
    %v1349 = vadd.f32 %v130, %v1348
    %v1350 = vpop.f32.mrb[0].mxu0
    %v1351 = vpop.f32.mrb[0].mxu0
    %1352 = vdwg.mxu0
    %v1353 = vxor.u32 %v1306, 2147483648
    %v1354 = vmul.f32 %v1353, 1.442695
    %v1355 = vpow.pop %v1354
    %v1356 = vadd.f32 %v1355, 1.0
    %v1357 = vrcp.pop %v1356
    %v1358 = vmul.f32 1.0, %v1357
    %v1359 = vxor.u32 %v1308, 2147483648
    %v1360 = vmul.f32 %v1359, 1.442695
    %v1361 = vpow.pop %v1360
    %v1362 = vadd.f32 %v1361, 1.0
    %v1363 = vrcp.pop %v1362
    %v1364 = vmul.f32 1.0, %v1363
    %v1365 = vtanh.pop %v1347
    %v1366 = vxor.u32 %v1349, 2147483648
    %v1367 = vmul.f32 %v1366, 1.442695
    %v1368 = vpow.pop %v1367
    %v1369 = vadd.f32 %v1368, 1.0
    %v1370 = vrcp.pop %v1369
    %v1371 = vmul.f32 1.0, %v1370
    %v1372 = vmul.f32 %v1364, %v1267
    %v1373 = vmul.f32 %v1358, %v1365
    %v1374 = vadd.f32 %v1372, %v1373
    %v1375 = vtanh.pop %v1374
    %v1376 = vmul.f32 %v1371, %v1375
    %s1377 = sadd.s32 %s135, 7
    %p1378 = scmp.lt.s32.totalorder %s1377, 8
    %s1379 = scalar_select %p1378, 1, 0
    %v1380 = vstv %s1379
    %vm1381 = vcmp.eq.s32.totalorder %v1380, 1
    %v1382 = vsel %vm1381, %v1376, %v1266
    %v1383 = vsel %vm1381, %v1374, %v1267
    %1384 = vst [vmem:[#allocation2] sm:$0xff] %v1382
    %1385 = vst [vmem:[#allocation3] sm:$0xff] %v1383
    // Predicated region
    $region26: #{tpu_custom_call.1} parent=1 // pred_check
      %p1386 = pneg %p43
    $region27: #{tpu_custom_call.1} parent=1 // pred_check_branch
      %1388 = sbr.rel (%p1386) target = $region29
    $region28: #{tpu_custom_call.1} parent=1 // pred_region
      %1389 = vst [vmem:[#allocation9] sm:$0xff] %v1382
    $region29: #{tpu_custom_call.1} parent=1 // pred_fallthru
      _
    // Predicated region
    $region30: #{tpu_custom_call.1} parent=1 // pred_check
      _
    $region31: #{tpu_custom_call.1} parent=1 // pred_check_branch
      %1391 = sbr.rel (0) target = $region33
    $region32: #{tpu_custom_call.1} parent=1 // pred_region
      %s1393 = ssub.s32 128, 128
      %1394 = vsyncadd [#allocation6], %s1393
      %s1396 = sshll.u32 [#allocation9], 4
      %s1397 = int_to_ptr.vmem [resolvable:$true] %s1396
      %1399 = dma.vmem_to_hbm [thread:$0]  %s1397, 128, %s3, [#allocation6]
    $region33: #{tpu_custom_call.1} parent=1 // pred_fallthru
      _
    // Predicated region
    $region34: #{tpu_custom_call.1} parent=1 // pred_check
      _
    $region35: #{tpu_custom_call.1} parent=1 // pred_check_branch
      %1401 = sbr.rel (0) target = $region37
    $region36: #{tpu_custom_call.1} parent=1 // pred_region
      %1402 = dma.done [#allocation6], 128
    $region37: #{tpu_custom_call.1} parent=1 // pred_fallthru
      _
    %1403 = vsyncpa [#allocation5], 1
    %1404 = vsyncpa [#allocation8], 1
    %1405 = vsyncpa [#allocation6], 1

</llo_original>
